<compile_context>
chip_gen: v6e
topology: v6e:2x2x1
jax: 0.10.0
libtpu: 0.0.40
codegen_flags: <defaults>
</compile_context>

<pallas_src>
import jax
import jax.numpy as jnp
import numpy as np
from jax import lax
from jax.experimental import pallas as pl
from jax.experimental.pallas import tpu as pltpu  # noqa: F401  (TPU backend)

D_MODEL = 64
N_HEAD = 8
HEAD_DIM = D_MODEL // N_HEAD
D_FF = 256
N_LAYERS = 2
VOCAB = 64
N_CLASSES = 2
LN_EPS = 1e-5
NEG_INF = -1e30  # additive mask value (exp underflows to exactly 0 in f32)

N_LAYER_REFS = 12   # refs per encoder layer
N_GLOBAL_IN = 5     # x, mask_bias, blockmask, block_ones, sel
MM_PREC = lax.Precision.DEFAULT


def _bf16(x):
    return x.astype(jnp.bfloat16)


def _layer_norm(x, w, b):
    mu = jnp.mean(x, axis=-1, keepdims=True)
    var = jnp.mean((x - mu) ** 2, axis=-1, keepdims=True)
    return (x - mu) * lax.rsqrt(var + LN_EPS) * w + b


# ----------------------------------------------------------------------------
# Fused Pallas kernel (single program, no grid)
# ----------------------------------------------------------------------------
def _encoder_layer(x2, maskb, blockmask, block_ones, lrefs, B, S):
    """One post-norm TransformerEncoderLayer.

    x2:         (B*S, D)   f32 activations
    maskb:      (B, S, H*S) f32 additive key-padding bias (packed-head layout)
    blockmask:  (H*S, D)   f32 block-diagonal 0/1 mask
    block_ones: (H*S, H*S) bf16 within-block ones (softmax denominator matmul)
    """
    (wqkv_ref, bqkv_ref, wo_ref, bo_ref, ln1w_ref, ln1b_ref,
     w1_ref, b1_ref, w2_ref, b2_ref, ln2w_ref, ln2b_ref) = lrefs
    BS, D = x2.shape
    M = N_HEAD * S

    # Fused QKV projection (Q columns pre-scaled by 1/sqrt(HEAD_DIM)).
    qkv = jnp.dot(_bf16(x2), wqkv_ref[...],
                  preferred_element_type=jnp.float32,
                  precision=MM_PREC) + bqkv_ref[...]
    q3 = qkv[:, 0 * D:1 * D].reshape(B, S, D)
    k3 = qkv[:, 1 * D:2 * D].reshape(B, S, D)
    v3 = qkv[:, 2 * D:3 * D].reshape(B, S, D)

    # Block-diagonal packed K / V: row m = h*S+k holds key/value k with only
    # head h's feature columns kept, so one full-D contraction per query gives
    # every per-head score / context at once (all operands 64-lane dense).
    km = jnp.tile(k3, (1, N_HEAD, 1)) * blockmask        # (B, M, D) f32
    vm = jnp.tile(v3, (1, N_HEAD, 1)) * blockmask        # (B, M, D) f32

    s = jnp.einsum('bqd,bmd->bqm', _bf16(q3), _bf16(km),
                   preferred_element_type=jnp.float32,
                   precision=MM_PREC)                    # (B, S, M)
    s = s + maskb                                        # mask padded keys

    # One max-shift per layer over all heads: a per-(b,q) constant shift keeps
    # every per-head softmax exact (bf16 keeps the f32 exponent range).
    mx = jnp.max(s, axis=-1, keepdims=True)
    p = jnp.exp(s - mx)
    denom = jnp.dot(_bf16(p.reshape(BS, M)), block_ones,
                    preferred_element_type=jnp.float32,
                    precision=MM_PREC).reshape(B, S, M)  # per-head block sums
    p = p * pl.reciprocal(denom, approx=True)

    ctx = jnp.einsum('bqm,bmd->bqd', _bf16(p), _bf16(vm),
                     preferred_element_type=jnp.float32,
                     precision=MM_PREC)                  # (B, S, D), heads concatenated

    attn = jnp.dot(_bf16(ctx.reshape(BS, D)), wo_ref[...],
                   preferred_element_type=jnp.float32,
                   precision=MM_PREC) + bo_ref[...]

    x2 = _layer_norm(x2 + attn, ln1w_ref[...], ln1b_ref[...])

    h1 = jnp.maximum(
        jnp.dot(_bf16(x2), w1_ref[...], preferred_element_type=jnp.float32,
                precision=MM_PREC) + b1_ref[...], 0.0)
    h2 = jnp.dot(_bf16(h1), w2_ref[...], preferred_element_type=jnp.float32,
                 precision=MM_PREC) + b2_ref[...]
    return _layer_norm(x2 + h2, ln2w_ref[...], ln2b_ref[...])


def fused_forward_kernel(*refs):
    """Inputs:  x(B,S,D) f32, mask_bias(B,S,H*S) f32, blockmask(H*S,D) f32,
                block_ones(H*S,H*S) bf16, sel(B,B*S) bf16,
                12 refs per layer x N_LAYERS, fc_w bf16, fc_b f32.
       Output:  logits (B, N_CLASSES) f32."""
    x_ref, maskb_ref, bmask_ref, bones_ref, sel_ref = refs[:N_GLOBAL_IN]
    n_in = N_GLOBAL_IN + N_LAYERS * N_LAYER_REFS + 2
    fcw_ref, fcb_ref = refs[n_in - 2], refs[n_in - 1]
    o_ref = refs[n_in]

    B, S, D = x_ref.shape
    x2 = x_ref[...].reshape(B * S, D)          # whole batch, VMEM-resident
    maskb = maskb_ref[...]                     # hoisted once, reused per layer
    blockmask = bmask_ref[...]
    block_ones = bones_ref[...]

    for l in range(N_LAYERS):
        base = N_GLOBAL_IN + l * N_LAYER_REFS
        x2 = _encoder_layer(x2, maskb, blockmask, block_ones,
                            refs[base:base + N_LAYER_REFS], B, S)

    # Last sequence position of each batch element via a tiny precomputed
    # selection matmul (== x[-1, :, :] in seq-first layout).
    x_last = jnp.dot(sel_ref[...], _bf16(x2),
                     preferred_element_type=jnp.float32, precision=MM_PREC)
    o_ref[...] = jnp.dot(_bf16(x_last), fcw_ref[...],
                         preferred_element_type=jnp.float32,
                         precision=MM_PREC) + fcb_ref[...]


# ----------------------------------------------------------------------------
# Wrapper
# ----------------------------------------------------------------------------
def _flatten_layer_params(lp):
    """Fuse Wq/Wk/Wv (attention scale folded into the Q columns) and cast the
    matmul weights to bf16; biases / LayerNorm params stay f32."""
    scale = 1.0 / float(np.sqrt(HEAD_DIM))
    wqkv = jnp.concatenate([lp['wq'] * scale, lp['wk'], lp['wv']], axis=1)  # (D, 3D)
    bqkv = jnp.concatenate([lp['bq'] * scale, lp['bk'], lp['bv']], axis=1)  # (1, 3D)
    return [_bf16(wqkv), bqkv, _bf16(lp['wo']), lp['bo'], lp['ln1w'], lp['ln1b'],
            _bf16(lp['w1']), lp['b1'], _bf16(lp['w2']), lp['b2'],
            lp['ln2w'], lp['ln2b']]


def emg_transformer_forward(params, input_ids, attention_mask):
    # Glue in plain JAX: embedding gather, mask -> additive bias, static
    # head-packing matrices, last-token selector.
    x = jnp.take(params['emb'], input_ids, axis=0).astype(jnp.float32)   # (B, S, D)
    B, S, D = x.shape
    M = N_HEAD * S

    key_pad = attention_mask.T                                           # (B, S)
    bias = jnp.where(key_pad, NEG_INF, 0.0).astype(jnp.float32)          # (B, S)
    maskb = jnp.broadcast_to(jnp.tile(bias, (1, N_HEAD))[:, None, :], (B, S, M))

    m_idx = np.arange(M)
    blockmask = jnp.asarray(
        (m_idx[:, None] // S) == (np.arange(D_MODEL)[None, :] // HEAD_DIM),
        dtype=jnp.float32)                                               # (M, D)
    block_ones = jnp.asarray(
        (m_idx[:, None] // S) == (m_idx[None, :] // S), dtype=jnp.bfloat16)  # (M, M)
    sel = jax.nn.one_hot(jnp.arange(B) * S + (S - 1), B * S,
                         dtype=jnp.bfloat16)                             # (B, B*S)

    flat = []
    for lp in params['layers']:
        flat += _flatten_layer_params(lp)

    # Single grid-less pallas_call: every operand is a whole-array VMEM block.
    return pl.pallas_call(
        fused_forward_kernel,
        out_shape=jax.ShapeDtypeStruct((B, N_CLASSES), jnp.float32),
    )(x, maskb, blockmask, block_ones, sel, *flat,
      _bf16(params['fc_w']), params['fc_b'])


# ----------------------------------------------------------------------------
# Deterministic parameter init (synthetic; weights stored in "x @ W + b" form)
# ----------------------------------------------------------------------------
def init_params(key):
    keys = iter(jax.random.split(key, 32))

    def nrm(shape, scale):
        return (scale * jax.random.normal(next(keys), shape)).astype(jnp.float32)

    params = {'emb': nrm((VOCAB, D_MODEL), 1.0), 'layers': []}
    for _ in range(N_LAYERS):
        lp = {
            'wq': nrm((D_MODEL, D_MODEL), 0.125), 'bq': nrm((1, D_MODEL), 0.02),
            'wk': nrm((D_MODEL, D_MODEL), 0.125), 'bk': nrm((1, D_MODEL), 0.02),
            'wv': nrm((D_MODEL, D_MODEL), 0.125), 'bv': nrm((1, D_MODEL), 0.02),
            'wo': nrm((D_MODEL, D_MODEL), 0.125), 'bo': nrm((1, D_MODEL), 0.02),
            'ln1w': jnp.ones((1, D_MODEL), jnp.float32),
            'ln1b': jnp.zeros((1, D_MODEL), jnp.float32),
            'w1': nrm((D_MODEL, D_FF), 0.125), 'b1': nrm((1, D_FF), 0.02),
            'w2': nrm((D_FF, D_MODEL), 0.0625), 'b2': nrm((1, D_MODEL), 0.02),
            'ln2w': jnp.ones((1, D_MODEL), jnp.float32),
            'ln2b': jnp.zeros((1, D_MODEL), jnp.float32),
        }
        params['layers'].append(lp)
    params['fc_w'] = nrm((D_MODEL, N_CLASSES), 0.125)
    params['fc_b'] = jnp.zeros((1, N_CLASSES), jnp.float32)
    return params


# ----------------------------------------------------------------------------
# Pure-JAX f32 reference (same math) for a correctness check
# ----------------------------------------------------------------------------
def reference_forward(params, input_ids, attention_mask):
    x = jnp.take(params['emb'], input_ids, axis=0).astype(jnp.float32)   # (B, S, D)
    key_pad = attention_mask.T
    mask_bias = jnp.where(key_pad, NEG_INF, 0.0).astype(jnp.float32)     # (B, S)
    B, S, D = x.shape
    for lp in params['layers']:
        q = (x @ lp['wq'] + lp['bq']).reshape(B, S, N_HEAD, HEAD_DIM)
        k = (x @ lp['wk'] + lp['bk']).reshape(B, S, N_HEAD, HEAD_DIM)
        v = (x @ lp['wv'] + lp['bv']).reshape(B, S, N_HEAD, HEAD_DIM)
        s = jnp.einsum('bshd,bthd->bhst', q, k) / np.sqrt(HEAD_DIM)
        s = s + mask_bias[:, None, None, :]
        p = jax.nn.softmax(s, axis=-1)
        ctx = jnp.einsum('bhst,bthd->bshd', p, v).reshape(B, S, D)
        attn = ctx @ lp['wo'] + lp['bo']
        x = _layer_norm(x + attn, lp['ln1w'], lp['ln1b'])
        h = jax.nn.relu(x @ lp['w1'] + lp['b1'])
        x = _layer_norm(x + h @ lp['w2'] + lp['b2'], lp['ln2w'], lp['ln2b'])
    return x[:, -1, :] @ params['fc_w'] + params['fc_b']


if __name__ == "__main__":
    # 'highest' makes the pure-JAX reference true f32; the kernel's matmuls use
    # explicit bf16 inputs + f32 accumulation and are unaffected by this flag.
    jax.config.update("jax_default_matmul_precision", "highest")

    key = jax.random.PRNGKey(0)
    pkey, ikey = jax.random.split(key, 2)
    params = init_params(pkey)

    B, S = 2, 8
    input_ids = jax.random.randint(ikey, (B, S), 0, VOCAB, dtype=jnp.int32)   # (B, S)
    # attention_mask is seq-first (S, B) bool; True = padded key position.
    attention_mask = jnp.zeros((S, B), dtype=bool).at[-2:, 1].set(True)

    fwd = jax.jit(emg_transformer_forward)
    out = fwd(params, input_ids, attention_mask)
    out = jax.block_until_ready(out)
    assert out.shape == (B, N_CLASSES)

    ref = reference_forward(params, input_ids, attention_mask)
    # Tolerance accounts for bf16 MXU inputs (f32 accumulate) vs f32 reference.
    np.testing.assert_allclose(np.asarray(out), np.asarray(ref), rtol=5e-2, atol=5e-2)

    print("KERNEL_OK")
</pallas_src>

<mosaic_0001>
module attributes {stable_mosaic.version = 11 : i64} {
  func.func @fused_forward_kernel(%arg0: memref<2x8x64xf32, #tpu.memory_space<vmem>>, %arg1: memref<2x8x64xf32, #tpu.memory_space<vmem>>, %arg2: memref<64x64xf32, #tpu.memory_space<vmem>>, %arg3: memref<64x64xbf16, #tpu.memory_space<vmem>>, %arg4: memref<2x16xbf16, #tpu.memory_space<vmem>>, %arg5: memref<64x192xbf16, #tpu.memory_space<vmem>>, %arg6: memref<1x192xf32, #tpu.memory_space<vmem>>, %arg7: memref<64x64xbf16, #tpu.memory_space<vmem>>, %arg8: memref<1x64xf32, #tpu.memory_space<vmem>>, %arg9: memref<1x64xf32, #tpu.memory_space<vmem>>, %arg10: memref<1x64xf32, #tpu.memory_space<vmem>>, %arg11: memref<64x256xbf16, #tpu.memory_space<vmem>>, %arg12: memref<1x256xf32, #tpu.memory_space<vmem>>, %arg13: memref<256x64xbf16, #tpu.memory_space<vmem>>, %arg14: memref<1x64xf32, #tpu.memory_space<vmem>>, %arg15: memref<1x64xf32, #tpu.memory_space<vmem>>, %arg16: memref<1x64xf32, #tpu.memory_space<vmem>>, %arg17: memref<64x192xbf16, #tpu.memory_space<vmem>>, %arg18: memref<1x192xf32, #tpu.memory_space<vmem>>, %arg19: memref<64x64xbf16, #tpu.memory_space<vmem>>, %arg20: memref<1x64xf32, #tpu.memory_space<vmem>>, %arg21: memref<1x64xf32, #tpu.memory_space<vmem>>, %arg22: memref<1x64xf32, #tpu.memory_space<vmem>>, %arg23: memref<64x256xbf16, #tpu.memory_space<vmem>>, %arg24: memref<1x256xf32, #tpu.memory_space<vmem>>, %arg25: memref<256x64xbf16, #tpu.memory_space<vmem>>, %arg26: memref<1x64xf32, #tpu.memory_space<vmem>>, %arg27: memref<1x64xf32, #tpu.memory_space<vmem>>, %arg28: memref<1x64xf32, #tpu.memory_space<vmem>>, %arg29: memref<64x2xbf16, #tpu.memory_space<vmem>>, %arg30: memref<1x2xf32, #tpu.memory_space<vmem>>, %arg31: memref<2x2xf32, #tpu.memory_space<vmem>>) attributes {dimension_semantics = [], scalar_prefetch = 0 : i64, scratch_operands = 0 : i64, tpu.core_type = #tpu.core_type<tc>} {
    %c0 = arith.constant 0 : index
    %c0_0 = arith.constant 0 : index
    %c0_1 = arith.constant 0 : index
    %0 = vector.load %arg0[%c0, %c0_0, %c0_1] : memref<2x8x64xf32, #tpu.memory_space<vmem>>, vector<2x8x64xf32>
    %1 = vector.shape_cast %0 : vector<2x8x64xf32> to vector<16x64xf32>
    %c0_2 = arith.constant 0 : index
    %c0_3 = arith.constant 0 : index
    %c0_4 = arith.constant 0 : index
    %2 = vector.load %arg1[%c0_2, %c0_3, %c0_4] : memref<2x8x64xf32, #tpu.memory_space<vmem>>, vector<2x8x64xf32>
    %c0_5 = arith.constant 0 : index
    %c0_6 = arith.constant 0 : index
    %3 = vector.load %arg2[%c0_5, %c0_6] : memref<64x64xf32, #tpu.memory_space<vmem>>, vector<64x64xf32>
    %c0_7 = arith.constant 0 : index
    %c0_8 = arith.constant 0 : index
    %4 = vector.load %arg3[%c0_7, %c0_8] : memref<64x64xbf16, #tpu.memory_space<vmem>>, vector<64x64xbf16>
    %5 = arith.truncf %1 : vector<16x64xf32> to vector<16x64xbf16>
    %c0_9 = arith.constant 0 : index
    %c0_10 = arith.constant 0 : index
    %6 = vector.load %arg5[%c0_9, %c0_10] : memref<64x192xbf16, #tpu.memory_space<vmem>>, vector<64x192xbf16>
    %cst = arith.constant dense<0.000000e+00> : vector<16x192xf32>
    %7 = tpu.matmul %5, %6, %cst {dimension_numbers = #tpu.dot_dimension_numbers<[1], [0], [0], [1], [0, 0, 1, 1], [], []>} : vector<16x64xbf16>, vector<64x192xbf16>, vector<16x192xf32> -> vector<16x192xf32>
    %c0_11 = arith.constant 0 : index
    %c0_12 = arith.constant 0 : index
    %8 = vector.load %arg6[%c0_11, %c0_12] : memref<1x192xf32, #tpu.memory_space<vmem>>, vector<1x192xf32>
    %9 = vector.broadcast %8 : vector<1x192xf32> to vector<16x192xf32>
    %10 = arith.addf %7, %9 : vector<16x192xf32>
    %11 = vector.extract_strided_slice %10 {offsets = [0, 0], sizes = [16, 64], strides = [1, 1]} : vector<16x192xf32> to vector<16x64xf32>
    %12 = vector.shape_cast %11 : vector<16x64xf32> to vector<2x8x64xf32>
    %13 = vector.extract_strided_slice %10 {offsets = [0, 64], sizes = [16, 64], strides = [1, 1]} : vector<16x192xf32> to vector<16x64xf32>
    %14 = vector.shape_cast %13 : vector<16x64xf32> to vector<2x8x64xf32>
    %15 = vector.extract_strided_slice %10 {offsets = [0, 128], sizes = [16, 64], strides = [1, 1]} : vector<16x192xf32> to vector<16x64xf32>
    %16 = vector.shape_cast %15 : vector<16x64xf32> to vector<2x8x64xf32>
    %17 = tpu.concatenate %14, %14, %14, %14, %14, %14, %14, %14 in 1 : vector<2x8x64xf32>, vector<2x8x64xf32>, vector<2x8x64xf32>, vector<2x8x64xf32>, vector<2x8x64xf32>, vector<2x8x64xf32>, vector<2x8x64xf32>, vector<2x8x64xf32> -> vector<2x64x64xf32>
    %18 = vector.shape_cast %3 : vector<64x64xf32> to vector<1x64x64xf32>
    %19 = vector.broadcast %18 : vector<1x64x64xf32> to vector<2x64x64xf32>
    %20 = arith.mulf %17, %19 : vector<2x64x64xf32>
    %21 = tpu.concatenate %16, %16, %16, %16, %16, %16, %16, %16 in 1 : vector<2x8x64xf32>, vector<2x8x64xf32>, vector<2x8x64xf32>, vector<2x8x64xf32>, vector<2x8x64xf32>, vector<2x8x64xf32>, vector<2x8x64xf32>, vector<2x8x64xf32> -> vector<2x64x64xf32>
    %22 = vector.shape_cast %3 : vector<64x64xf32> to vector<1x64x64xf32>
    %23 = vector.broadcast %22 : vector<1x64x64xf32> to vector<2x64x64xf32>
    %24 = arith.mulf %21, %23 : vector<2x64x64xf32>
    %25 = arith.truncf %12 : vector<2x8x64xf32> to vector<2x8x64xbf16>
    %26 = arith.truncf %20 : vector<2x64x64xf32> to vector<2x64x64xbf16>
    "tpu.trace_start"() <{level = 10 : i32, message = "bqd,bmd->bqm"}> : () -> ()
    %cst_13 = arith.constant dense<0.000000e+00> : vector<2x8x64xf32>
    %27 = tpu.matmul %25, %26, %cst_13 {dimension_numbers = #tpu.dot_dimension_numbers<[2], [2], [1], [1], [0, 0, 0, 1, 1, 1], [0], [0]>} : vector<2x8x64xbf16>, vector<2x64x64xbf16>, vector<2x8x64xf32> -> vector<2x8x64xf32>
    "tpu.trace_stop"() : () -> ()
    %28 = arith.addf %27, %2 : vector<2x8x64xf32>
    %cst_14 = arith.constant dense<0xFF800000> : vector<2x8xf32>
    %29 = vector.multi_reduction <maximumf>, %28, %cst_14 [2] : vector<2x8x64xf32> to vector<2x8xf32>
    %30 = vector.shape_cast %29 : vector<2x8xf32> to vector<2x8x1xf32>
    %31 = vector.broadcast %30 : vector<2x8x1xf32> to vector<2x8x64xf32>
    %32 = arith.subf %28, %31 : vector<2x8x64xf32>
    %33 = math.exp %32 : vector<2x8x64xf32>
    %34 = vector.shape_cast %33 : vector<2x8x64xf32> to vector<16x64xf32>
    %35 = arith.truncf %34 : vector<16x64xf32> to vector<16x64xbf16>
    %cst_15 = arith.constant dense<0.000000e+00> : vector<16x64xf32>
    %36 = tpu.matmul %35, %4, %cst_15 {dimension_numbers = #tpu.dot_dimension_numbers<[1], [0], [0], [1], [0, 0, 1, 1], [], []>} : vector<16x64xbf16>, vector<64x64xbf16>, vector<16x64xf32> -> vector<16x64xf32>
    %37 = vector.shape_cast %36 : vector<16x64xf32> to vector<2x8x64xf32>
    %38 = tpu.reciprocal %37 {approx = true} : vector<2x8x64xf32> -> vector<2x8x64xf32>
    %39 = arith.mulf %33, %38 : vector<2x8x64xf32>
    %40 = arith.truncf %39 : vector<2x8x64xf32> to vector<2x8x64xbf16>
    %41 = arith.truncf %24 : vector<2x64x64xf32> to vector<2x64x64xbf16>
    "tpu.trace_start"() <{level = 10 : i32, message = "bqm,bmd->bqd"}> : () -> ()
    %cst_16 = arith.constant dense<0.000000e+00> : vector<2x8x64xf32>
    %42 = tpu.matmul %40, %41, %cst_16 {dimension_numbers = #tpu.dot_dimension_numbers<[2], [1], [1], [2], [0, 0, 0, 1, 1, 2], [0], [0]>} : vector<2x8x64xbf16>, vector<2x64x64xbf16>, vector<2x8x64xf32> -> vector<2x8x64xf32>
    "tpu.trace_stop"() : () -> ()
    %43 = vector.shape_cast %42 : vector<2x8x64xf32> to vector<16x64xf32>
    %44 = arith.truncf %43 : vector<16x64xf32> to vector<16x64xbf16>
    %c0_17 = arith.constant 0 : index
    %c0_18 = arith.constant 0 : index
    %45 = vector.load %arg7[%c0_17, %c0_18] : memref<64x64xbf16, #tpu.memory_space<vmem>>, vector<64x64xbf16>
    %cst_19 = arith.constant dense<0.000000e+00> : vector<16x64xf32>
    %46 = tpu.matmul %44, %45, %cst_19 {dimension_numbers = #tpu.dot_dimension_numbers<[1], [0], [0], [1], [0, 0, 1, 1], [], []>} : vector<16x64xbf16>, vector<64x64xbf16>, vector<16x64xf32> -> vector<16x64xf32>
    %c0_20 = arith.constant 0 : index
    %c0_21 = arith.constant 0 : index
    %47 = vector.load %arg8[%c0_20, %c0_21] : memref<1x64xf32, #tpu.memory_space<vmem>>, vector<1x64xf32>
    %48 = vector.broadcast %47 : vector<1x64xf32> to vector<16x64xf32>
    %49 = arith.addf %46, %48 : vector<16x64xf32>
    %50 = arith.addf %1, %49 : vector<16x64xf32>
    %c0_22 = arith.constant 0 : index
    %c0_23 = arith.constant 0 : index
    %51 = vector.load %arg9[%c0_22, %c0_23] : memref<1x64xf32, #tpu.memory_space<vmem>>, vector<1x64xf32>
    %c0_24 = arith.constant 0 : index
    %c0_25 = arith.constant 0 : index
    %52 = vector.load %arg10[%c0_24, %c0_25] : memref<1x64xf32, #tpu.memory_space<vmem>>, vector<1x64xf32>
    %cst_26 = arith.constant dense<0.000000e+00> : vector<16xf32>
    %53 = vector.multi_reduction <add>, %50, %cst_26 [1] : vector<16x64xf32> to vector<16xf32>
    %54 = vector.shape_cast %53 : vector<16xf32> to vector<16x1xf32>
    %cst_27 = arith.constant 6.400000e+01 : f32
    %55 = vector.broadcast %cst_27 : f32 to vector<16x1xf32>
    %56 = arith.divf %54, %55 : vector<16x1xf32>
    %57 = vector.broadcast %56 : vector<16x1xf32> to vector<16x64xf32>
    %58 = arith.subf %50, %57 : vector<16x64xf32>
    %59 = arith.mulf %58, %58 : vector<16x64xf32>
    %cst_28 = arith.constant dense<0.000000e+00> : vector<16xf32>
    %60 = vector.multi_reduction <add>, %59, %cst_28 [1] : vector<16x64xf32> to vector<16xf32>
    %61 = vector.shape_cast %60 : vector<16xf32> to vector<16x1xf32>
    %cst_29 = arith.constant 6.400000e+01 : f32
    %62 = vector.broadcast %cst_29 : f32 to vector<16x1xf32>
    %63 = arith.divf %61, %62 : vector<16x1xf32>
    %64 = vector.broadcast %56 : vector<16x1xf32> to vector<16x64xf32>
    %65 = arith.subf %50, %64 : vector<16x64xf32>
    %cst_30 = arith.constant 9.99999974E-6 : f32
    %66 = vector.broadcast %cst_30 : f32 to vector<16x1xf32>
    %67 = arith.addf %63, %66 : vector<16x1xf32>
    %68 = math.rsqrt %67 : vector<16x1xf32>
    %69 = vector.broadcast %68 : vector<16x1xf32> to vector<16x64xf32>
    %70 = arith.mulf %65, %69 : vector<16x64xf32>
    %71 = vector.broadcast %51 : vector<1x64xf32> to vector<16x64xf32>
    %72 = arith.mulf %70, %71 : vector<16x64xf32>
    %73 = vector.broadcast %52 : vector<1x64xf32> to vector<16x64xf32>
    %74 = arith.addf %72, %73 : vector<16x64xf32>
    %75 = arith.truncf %74 : vector<16x64xf32> to vector<16x64xbf16>
    %c0_31 = arith.constant 0 : index
    %c0_32 = arith.constant 0 : index
    %76 = vector.load %arg11[%c0_31, %c0_32] : memref<64x256xbf16, #tpu.memory_space<vmem>>, vector<64x256xbf16>
    %cst_33 = arith.constant dense<0.000000e+00> : vector<16x256xf32>
    %77 = tpu.matmul %75, %76, %cst_33 {dimension_numbers = #tpu.dot_dimension_numbers<[1], [0], [0], [1], [0, 0, 1, 1], [], []>} : vector<16x64xbf16>, vector<64x256xbf16>, vector<16x256xf32> -> vector<16x256xf32>
    %c0_34 = arith.constant 0 : index
    %c0_35 = arith.constant 0 : index
    %78 = vector.load %arg12[%c0_34, %c0_35] : memref<1x256xf32, #tpu.memory_space<vmem>>, vector<1x256xf32>
    %79 = vector.broadcast %78 : vector<1x256xf32> to vector<16x256xf32>
    %80 = arith.addf %77, %79 : vector<16x256xf32>
    %cst_36 = arith.constant 0.000000e+00 : f32
    %81 = vector.broadcast %cst_36 : f32 to vector<16x256xf32>
    %82 = arith.maximumf %80, %81 : vector<16x256xf32>
    %83 = arith.truncf %82 : vector<16x256xf32> to vector<16x256xbf16>
    %c0_37 = arith.constant 0 : index
    %c0_38 = arith.constant 0 : index
    %84 = vector.load %arg13[%c0_37, %c0_38] : memref<256x64xbf16, #tpu.memory_space<vmem>>, vector<256x64xbf16>
    %cst_39 = arith.constant dense<0.000000e+00> : vector<16x64xf32>
    %85 = tpu.matmul %83, %84, %cst_39 {dimension_numbers = #tpu.dot_dimension_numbers<[1], [0], [0], [1], [0, 0, 1, 1], [], []>} : vector<16x256xbf16>, vector<256x64xbf16>, vector<16x64xf32> -> vector<16x64xf32>
    %c0_40 = arith.constant 0 : index
    %c0_41 = arith.constant 0 : index
    %86 = vector.load %arg14[%c0_40, %c0_41] : memref<1x64xf32, #tpu.memory_space<vmem>>, vector<1x64xf32>
    %87 = vector.broadcast %86 : vector<1x64xf32> to vector<16x64xf32>
    %88 = arith.addf %85, %87 : vector<16x64xf32>
    %89 = arith.addf %74, %88 : vector<16x64xf32>
    %c0_42 = arith.constant 0 : index
    %c0_43 = arith.constant 0 : index
    %90 = vector.load %arg15[%c0_42, %c0_43] : memref<1x64xf32, #tpu.memory_space<vmem>>, vector<1x64xf32>
    %c0_44 = arith.constant 0 : index
    %c0_45 = arith.constant 0 : index
    %91 = vector.load %arg16[%c0_44, %c0_45] : memref<1x64xf32, #tpu.memory_space<vmem>>, vector<1x64xf32>
    %cst_46 = arith.constant dense<0.000000e+00> : vector<16xf32>
    %92 = vector.multi_reduction <add>, %89, %cst_46 [1] : vector<16x64xf32> to vector<16xf32>
    %93 = vector.shape_cast %92 : vector<16xf32> to vector<16x1xf32>
    %cst_47 = arith.constant 6.400000e+01 : f32
    %94 = vector.broadcast %cst_47 : f32 to vector<16x1xf32>
    %95 = arith.divf %93, %94 : vector<16x1xf32>
    %96 = vector.broadcast %95 : vector<16x1xf32> to vector<16x64xf32>
    %97 = arith.subf %89, %96 : vector<16x64xf32>
    %98 = arith.mulf %97, %97 : vector<16x64xf32>
    %cst_48 = arith.constant dense<0.000000e+00> : vector<16xf32>
    %99 = vector.multi_reduction <add>, %98, %cst_48 [1] : vector<16x64xf32> to vector<16xf32>
    %100 = vector.shape_cast %99 : vector<16xf32> to vector<16x1xf32>
    %cst_49 = arith.constant 6.400000e+01 : f32
    %101 = vector.broadcast %cst_49 : f32 to vector<16x1xf32>
    %102 = arith.divf %100, %101 : vector<16x1xf32>
    %103 = vector.broadcast %95 : vector<16x1xf32> to vector<16x64xf32>
    %104 = arith.subf %89, %103 : vector<16x64xf32>
    %cst_50 = arith.constant 9.99999974E-6 : f32
    %105 = vector.broadcast %cst_50 : f32 to vector<16x1xf32>
    %106 = arith.addf %102, %105 : vector<16x1xf32>
    %107 = math.rsqrt %106 : vector<16x1xf32>
    %108 = vector.broadcast %107 : vector<16x1xf32> to vector<16x64xf32>
    %109 = arith.mulf %104, %108 : vector<16x64xf32>
    %110 = vector.broadcast %90 : vector<1x64xf32> to vector<16x64xf32>
    %111 = arith.mulf %109, %110 : vector<16x64xf32>
    %112 = vector.broadcast %91 : vector<1x64xf32> to vector<16x64xf32>
    %113 = arith.addf %111, %112 : vector<16x64xf32>
    %114 = arith.truncf %113 : vector<16x64xf32> to vector<16x64xbf16>
    %c0_51 = arith.constant 0 : index
    %c0_52 = arith.constant 0 : index
    %115 = vector.load %arg17[%c0_51, %c0_52] : memref<64x192xbf16, #tpu.memory_space<vmem>>, vector<64x192xbf16>
    %cst_53 = arith.constant dense<0.000000e+00> : vector<16x192xf32>
    %116 = tpu.matmul %114, %115, %cst_53 {dimension_numbers = #tpu.dot_dimension_numbers<[1], [0], [0], [1], [0, 0, 1, 1], [], []>} : vector<16x64xbf16>, vector<64x192xbf16>, vector<16x192xf32> -> vector<16x192xf32>
    %c0_54 = arith.constant 0 : index
    %c0_55 = arith.constant 0 : index
    %117 = vector.load %arg18[%c0_54, %c0_55] : memref<1x192xf32, #tpu.memory_space<vmem>>, vector<1x192xf32>
    %118 = vector.broadcast %117 : vector<1x192xf32> to vector<16x192xf32>
    %119 = arith.addf %116, %118 : vector<16x192xf32>
    %120 = vector.extract_strided_slice %119 {offsets = [0, 0], sizes = [16, 64], strides = [1, 1]} : vector<16x192xf32> to vector<16x64xf32>
    %121 = vector.shape_cast %120 : vector<16x64xf32> to vector<2x8x64xf32>
    %122 = vector.extract_strided_slice %119 {offsets = [0, 64], sizes = [16, 64], strides = [1, 1]} : vector<16x192xf32> to vector<16x64xf32>
    %123 = vector.shape_cast %122 : vector<16x64xf32> to vector<2x8x64xf32>
    %124 = vector.extract_strided_slice %119 {offsets = [0, 128], sizes = [16, 64], strides = [1, 1]} : vector<16x192xf32> to vector<16x64xf32>
    %125 = vector.shape_cast %124 : vector<16x64xf32> to vector<2x8x64xf32>
    %126 = tpu.concatenate %123, %123, %123, %123, %123, %123, %123, %123 in 1 : vector<2x8x64xf32>, vector<2x8x64xf32>, vector<2x8x64xf32>, vector<2x8x64xf32>, vector<2x8x64xf32>, vector<2x8x64xf32>, vector<2x8x64xf32>, vector<2x8x64xf32> -> vector<2x64x64xf32>
    %127 = vector.shape_cast %3 : vector<64x64xf32> to vector<1x64x64xf32>
    %128 = vector.broadcast %127 : vector<1x64x64xf32> to vector<2x64x64xf32>
    %129 = arith.mulf %126, %128 : vector<2x64x64xf32>
    %130 = tpu.concatenate %125, %125, %125, %125, %125, %125, %125, %125 in 1 : vector<2x8x64xf32>, vector<2x8x64xf32>, vector<2x8x64xf32>, vector<2x8x64xf32>, vector<2x8x64xf32>, vector<2x8x64xf32>, vector<2x8x64xf32>, vector<2x8x64xf32> -> vector<2x64x64xf32>
    %131 = vector.shape_cast %3 : vector<64x64xf32> to vector<1x64x64xf32>
    %132 = vector.broadcast %131 : vector<1x64x64xf32> to vector<2x64x64xf32>
    %133 = arith.mulf %130, %132 : vector<2x64x64xf32>
    %134 = arith.truncf %121 : vector<2x8x64xf32> to vector<2x8x64xbf16>
    %135 = arith.truncf %129 : vector<2x64x64xf32> to vector<2x64x64xbf16>
    "tpu.trace_start"() <{level = 10 : i32, message = "bqd,bmd->bqm"}> : () -> ()
    %cst_56 = arith.constant dense<0.000000e+00> : vector<2x8x64xf32>
    %136 = tpu.matmul %134, %135, %cst_56 {dimension_numbers = #tpu.dot_dimension_numbers<[2], [2], [1], [1], [0, 0, 0, 1, 1, 1], [0], [0]>} : vector<2x8x64xbf16>, vector<2x64x64xbf16>, vector<2x8x64xf32> -> vector<2x8x64xf32>
    "tpu.trace_stop"() : () -> ()
    %137 = arith.addf %136, %2 : vector<2x8x64xf32>
    %cst_57 = arith.constant dense<0xFF800000> : vector<2x8xf32>
    %138 = vector.multi_reduction <maximumf>, %137, %cst_57 [2] : vector<2x8x64xf32> to vector<2x8xf32>
    %139 = vector.shape_cast %138 : vector<2x8xf32> to vector<2x8x1xf32>
    %140 = vector.broadcast %139 : vector<2x8x1xf32> to vector<2x8x64xf32>
    %141 = arith.subf %137, %140 : vector<2x8x64xf32>
    %142 = math.exp %141 : vector<2x8x64xf32>
    %143 = vector.shape_cast %142 : vector<2x8x64xf32> to vector<16x64xf32>
    %144 = arith.truncf %143 : vector<16x64xf32> to vector<16x64xbf16>
    %cst_58 = arith.constant dense<0.000000e+00> : vector<16x64xf32>
    %145 = tpu.matmul %144, %4, %cst_58 {dimension_numbers = #tpu.dot_dimension_numbers<[1], [0], [0], [1], [0, 0, 1, 1], [], []>} : vector<16x64xbf16>, vector<64x64xbf16>, vector<16x64xf32> -> vector<16x64xf32>
    %146 = vector.shape_cast %145 : vector<16x64xf32> to vector<2x8x64xf32>
    %147 = tpu.reciprocal %146 {approx = true} : vector<2x8x64xf32> -> vector<2x8x64xf32>
    %148 = arith.mulf %142, %147 : vector<2x8x64xf32>
    %149 = arith.truncf %148 : vector<2x8x64xf32> to vector<2x8x64xbf16>
    %150 = arith.truncf %133 : vector<2x64x64xf32> to vector<2x64x64xbf16>
    "tpu.trace_start"() <{level = 10 : i32, message = "bqm,bmd->bqd"}> : () -> ()
    %cst_59 = arith.constant dense<0.000000e+00> : vector<2x8x64xf32>
    %151 = tpu.matmul %149, %150, %cst_59 {dimension_numbers = #tpu.dot_dimension_numbers<[2], [1], [1], [2], [0, 0, 0, 1, 1, 2], [0], [0]>} : vector<2x8x64xbf16>, vector<2x64x64xbf16>, vector<2x8x64xf32> -> vector<2x8x64xf32>
    "tpu.trace_stop"() : () -> ()
    %152 = vector.shape_cast %151 : vector<2x8x64xf32> to vector<16x64xf32>
    %153 = arith.truncf %152 : vector<16x64xf32> to vector<16x64xbf16>
    %c0_60 = arith.constant 0 : index
    %c0_61 = arith.constant 0 : index
    %154 = vector.load %arg19[%c0_60, %c0_61] : memref<64x64xbf16, #tpu.memory_space<vmem>>, vector<64x64xbf16>
    %cst_62 = arith.constant dense<0.000000e+00> : vector<16x64xf32>
    %155 = tpu.matmul %153, %154, %cst_62 {dimension_numbers = #tpu.dot_dimension_numbers<[1], [0], [0], [1], [0, 0, 1, 1], [], []>} : vector<16x64xbf16>, vector<64x64xbf16>, vector<16x64xf32> -> vector<16x64xf32>
    %c0_63 = arith.constant 0 : index
    %c0_64 = arith.constant 0 : index
    %156 = vector.load %arg20[%c0_63, %c0_64] : memref<1x64xf32, #tpu.memory_space<vmem>>, vector<1x64xf32>
    %157 = vector.broadcast %156 : vector<1x64xf32> to vector<16x64xf32>
    %158 = arith.addf %155, %157 : vector<16x64xf32>
    %159 = arith.addf %113, %158 : vector<16x64xf32>
    %c0_65 = arith.constant 0 : index
    %c0_66 = arith.constant 0 : index
    %160 = vector.load %arg21[%c0_65, %c0_66] : memref<1x64xf32, #tpu.memory_space<vmem>>, vector<1x64xf32>
    %c0_67 = arith.constant 0 : index
    %c0_68 = arith.constant 0 : index
    %161 = vector.load %arg22[%c0_67, %c0_68] : memref<1x64xf32, #tpu.memory_space<vmem>>, vector<1x64xf32>
    %cst_69 = arith.constant dense<0.000000e+00> : vector<16xf32>
    %162 = vector.multi_reduction <add>, %159, %cst_69 [1] : vector<16x64xf32> to vector<16xf32>
    %163 = vector.shape_cast %162 : vector<16xf32> to vector<16x1xf32>
    %cst_70 = arith.constant 6.400000e+01 : f32
    %164 = vector.broadcast %cst_70 : f32 to vector<16x1xf32>
    %165 = arith.divf %163, %164 : vector<16x1xf32>
    %166 = vector.broadcast %165 : vector<16x1xf32> to vector<16x64xf32>
    %167 = arith.subf %159, %166 : vector<16x64xf32>
    %168 = arith.mulf %167, %167 : vector<16x64xf32>
    %cst_71 = arith.constant dense<0.000000e+00> : vector<16xf32>
    %169 = vector.multi_reduction <add>, %168, %cst_71 [1] : vector<16x64xf32> to vector<16xf32>
    %170 = vector.shape_cast %169 : vector<16xf32> to vector<16x1xf32>
    %cst_72 = arith.constant 6.400000e+01 : f32
    %171 = vector.broadcast %cst_72 : f32 to vector<16x1xf32>
    %172 = arith.divf %170, %171 : vector<16x1xf32>
    %173 = vector.broadcast %165 : vector<16x1xf32> to vector<16x64xf32>
    %174 = arith.subf %159, %173 : vector<16x64xf32>
    %cst_73 = arith.constant 9.99999974E-6 : f32
    %175 = vector.broadcast %cst_73 : f32 to vector<16x1xf32>
    %176 = arith.addf %172, %175 : vector<16x1xf32>
    %177 = math.rsqrt %176 : vector<16x1xf32>
    %178 = vector.broadcast %177 : vector<16x1xf32> to vector<16x64xf32>
    %179 = arith.mulf %174, %178 : vector<16x64xf32>
    %180 = vector.broadcast %160 : vector<1x64xf32> to vector<16x64xf32>
    %181 = arith.mulf %179, %180 : vector<16x64xf32>
    %182 = vector.broadcast %161 : vector<1x64xf32> to vector<16x64xf32>
    %183 = arith.addf %181, %182 : vector<16x64xf32>
    %184 = arith.truncf %183 : vector<16x64xf32> to vector<16x64xbf16>
    %c0_74 = arith.constant 0 : index
    %c0_75 = arith.constant 0 : index
    %185 = vector.load %arg23[%c0_74, %c0_75] : memref<64x256xbf16, #tpu.memory_space<vmem>>, vector<64x256xbf16>
    %cst_76 = arith.constant dense<0.000000e+00> : vector<16x256xf32>
    %186 = tpu.matmul %184, %185, %cst_76 {dimension_numbers = #tpu.dot_dimension_numbers<[1], [0], [0], [1], [0, 0, 1, 1], [], []>} : vector<16x64xbf16>, vector<64x256xbf16>, vector<16x256xf32> -> vector<16x256xf32>
    %c0_77 = arith.constant 0 : index
    %c0_78 = arith.constant 0 : index
    %187 = vector.load %arg24[%c0_77, %c0_78] : memref<1x256xf32, #tpu.memory_space<vmem>>, vector<1x256xf32>
    %188 = vector.broadcast %187 : vector<1x256xf32> to vector<16x256xf32>
    %189 = arith.addf %186, %188 : vector<16x256xf32>
    %cst_79 = arith.constant 0.000000e+00 : f32
    %190 = vector.broadcast %cst_79 : f32 to vector<16x256xf32>
    %191 = arith.maximumf %189, %190 : vector<16x256xf32>
    %192 = arith.truncf %191 : vector<16x256xf32> to vector<16x256xbf16>
    %c0_80 = arith.constant 0 : index
    %c0_81 = arith.constant 0 : index
    %193 = vector.load %arg25[%c0_80, %c0_81] : memref<256x64xbf16, #tpu.memory_space<vmem>>, vector<256x64xbf16>
    %cst_82 = arith.constant dense<0.000000e+00> : vector<16x64xf32>
    %194 = tpu.matmul %192, %193, %cst_82 {dimension_numbers = #tpu.dot_dimension_numbers<[1], [0], [0], [1], [0, 0, 1, 1], [], []>} : vector<16x256xbf16>, vector<256x64xbf16>, vector<16x64xf32> -> vector<16x64xf32>
    %c0_83 = arith.constant 0 : index
    %c0_84 = arith.constant 0 : index
    %195 = vector.load %arg26[%c0_83, %c0_84] : memref<1x64xf32, #tpu.memory_space<vmem>>, vector<1x64xf32>
    %196 = vector.broadcast %195 : vector<1x64xf32> to vector<16x64xf32>
    %197 = arith.addf %194, %196 : vector<16x64xf32>
    %198 = arith.addf %183, %197 : vector<16x64xf32>
    %c0_85 = arith.constant 0 : index
    %c0_86 = arith.constant 0 : index
    %199 = vector.load %arg27[%c0_85, %c0_86] : memref<1x64xf32, #tpu.memory_space<vmem>>, vector<1x64xf32>
    %c0_87 = arith.constant 0 : index
    %c0_88 = arith.constant 0 : index
    %200 = vector.load %arg28[%c0_87, %c0_88] : memref<1x64xf32, #tpu.memory_space<vmem>>, vector<1x64xf32>
    %cst_89 = arith.constant dense<0.000000e+00> : vector<16xf32>
    %201 = vector.multi_reduction <add>, %198, %cst_89 [1] : vector<16x64xf32> to vector<16xf32>
    %202 = vector.shape_cast %201 : vector<16xf32> to vector<16x1xf32>
    %cst_90 = arith.constant 6.400000e+01 : f32
    %203 = vector.broadcast %cst_90 : f32 to vector<16x1xf32>
    %204 = arith.divf %202, %203 : vector<16x1xf32>
    %205 = vector.broadcast %204 : vector<16x1xf32> to vector<16x64xf32>
    %206 = arith.subf %198, %205 : vector<16x64xf32>
    %207 = arith.mulf %206, %206 : vector<16x64xf32>
    %cst_91 = arith.constant dense<0.000000e+00> : vector<16xf32>
    %208 = vector.multi_reduction <add>, %207, %cst_91 [1] : vector<16x64xf32> to vector<16xf32>
    %209 = vector.shape_cast %208 : vector<16xf32> to vector<16x1xf32>
    %cst_92 = arith.constant 6.400000e+01 : f32
    %210 = vector.broadcast %cst_92 : f32 to vector<16x1xf32>
    %211 = arith.divf %209, %210 : vector<16x1xf32>
    %212 = vector.broadcast %204 : vector<16x1xf32> to vector<16x64xf32>
    %213 = arith.subf %198, %212 : vector<16x64xf32>
    %cst_93 = arith.constant 9.99999974E-6 : f32
    %214 = vector.broadcast %cst_93 : f32 to vector<16x1xf32>
    %215 = arith.addf %211, %214 : vector<16x1xf32>
    %216 = math.rsqrt %215 : vector<16x1xf32>
    %217 = vector.broadcast %216 : vector<16x1xf32> to vector<16x64xf32>
    %218 = arith.mulf %213, %217 : vector<16x64xf32>
    %219 = vector.broadcast %199 : vector<1x64xf32> to vector<16x64xf32>
    %220 = arith.mulf %218, %219 : vector<16x64xf32>
    %221 = vector.broadcast %200 : vector<1x64xf32> to vector<16x64xf32>
    %222 = arith.addf %220, %221 : vector<16x64xf32>
    %c0_94 = arith.constant 0 : index
    %c0_95 = arith.constant 0 : index
    %223 = vector.load %arg4[%c0_94, %c0_95] : memref<2x16xbf16, #tpu.memory_space<vmem>>, vector<2x16xbf16>
    %224 = arith.truncf %222 : vector<16x64xf32> to vector<16x64xbf16>
    %cst_96 = arith.constant dense<0.000000e+00> : vector<2x64xf32>
    %225 = tpu.matmul %223, %224, %cst_96 {dimension_numbers = #tpu.dot_dimension_numbers<[1], [0], [0], [1], [0, 0, 1, 1], [], []>} : vector<2x16xbf16>, vector<16x64xbf16>, vector<2x64xf32> -> vector<2x64xf32>
    %226 = arith.truncf %225 : vector<2x64xf32> to vector<2x64xbf16>
    %c0_97 = arith.constant 0 : index
    %c0_98 = arith.constant 0 : index
    %227 = vector.load %arg29[%c0_97, %c0_98] : memref<64x2xbf16, #tpu.memory_space<vmem>>, vector<64x2xbf16>
    %cst_99 = arith.constant dense<0.000000e+00> : vector<2x2xf32>
    %228 = tpu.matmul %226, %227, %cst_99 {dimension_numbers = #tpu.dot_dimension_numbers<[1], [0], [0], [1], [0, 0, 1, 1], [], []>} : vector<2x64xbf16>, vector<64x2xbf16>, vector<2x2xf32> -> vector<2x2xf32>
    %c0_100 = arith.constant 0 : index
    %c0_101 = arith.constant 0 : index
    %229 = vector.load %arg30[%c0_100, %c0_101] : memref<1x2xf32, #tpu.memory_space<vmem>>, vector<1x2xf32>
    %230 = vector.broadcast %229 : vector<1x2xf32> to vector<2x2xf32>
    %231 = arith.addf %228, %230 : vector<2x2xf32>
    %c0_102 = arith.constant 0 : index
    %c0_103 = arith.constant 0 : index
    %232 = vector.load %arg31[%c0_102, %c0_103] : memref<2x2xf32, #tpu.memory_space<vmem>>, vector<2x2xf32>
    tpu.vector_store %arg31[%c0_102, %c0_103], %231 {strides = array<i32>} : memref<2x2xf32, #tpu.memory_space<vmem>>, vector<2x2xf32>,
    return
  }
}

</mosaic_0001>

<llo_original>
// kernel: emg_transformer_forward.1
$region0: #{emg_transformer_forward.1}
  #allocation0 [shape = 'u32[]', space=smem, size = 0x4, offset = 0x4, fixed_abs, tag = 'smem constant byte address 0x4 - core index']
  #allocation1 [shape = 'u32[144,128]{1,0:T(1,128)}', space=vmem, size = 0x12000, scoped, tag = 'internal scratch']
  %s0 = inlined_call_operand.smem [shape: u32[32], index: -1, kind: input, shape index: {}]
  %s1 = sld [smem:[%s0]]
  %s2 = scalar_lea.smem %s0, 1
  %s3 = sld [smem:[%s2]]
  %s4 = scalar_lea.smem %s0, 2
  %s5 = sld [smem:[%s4]]
  %s6 = scalar_lea.smem %s0, 3
  %s7 = sld [smem:[%s6]]
  %s8 = scalar_lea.smem %s0, 4
  %s9 = sld [smem:[%s8]]
  %s10 = scalar_lea.smem %s0, 5
  %s11 = sld [smem:[%s10]]
  %s12 = scalar_lea.smem %s0, 6
  %s13 = sld [smem:[%s12]]
  %s14 = scalar_lea.smem %s0, 7
  %s15 = sld [smem:[%s14]]
  %s16 = scalar_lea.smem %s0, 8
  %s17 = sld [smem:[%s16]]
  %s18 = scalar_lea.smem %s0, 9
  %s19 = sld [smem:[%s18]]
  %s20 = scalar_lea.smem %s0, 10
  %s21 = sld [smem:[%s20]]
  %s22 = scalar_lea.smem %s0, 11
  %s23 = sld [smem:[%s22]]
  %s24 = scalar_lea.smem %s0, 12
  %s25 = sld [smem:[%s24]]
  %s26 = scalar_lea.smem %s0, 13
  %s27 = sld [smem:[%s26]]
  %s28 = scalar_lea.smem %s0, 14
  %s29 = sld [smem:[%s28]]
  %s30 = scalar_lea.smem %s0, 15
  %s31 = sld [smem:[%s30]]
  %s32 = scalar_lea.smem %s0, 16
  %s33 = sld [smem:[%s32]]
  %s34 = scalar_lea.smem %s0, 17
  %s35 = sld [smem:[%s34]]
  %s36 = scalar_lea.smem %s0, 18
  %s37 = sld [smem:[%s36]]
  %s38 = scalar_lea.smem %s0, 19
  %s39 = sld [smem:[%s38]]
  %s40 = scalar_lea.smem %s0, 20
  %s41 = sld [smem:[%s40]]
  %s42 = scalar_lea.smem %s0, 21
  %s43 = sld [smem:[%s42]]
  %s44 = scalar_lea.smem %s0, 22
  %s45 = sld [smem:[%s44]]
  %s46 = scalar_lea.smem %s0, 23
  %s47 = sld [smem:[%s46]]
  %s48 = scalar_lea.smem %s0, 24
  %s49 = sld [smem:[%s48]]
  %s50 = scalar_lea.smem %s0, 25
  %s51 = sld [smem:[%s50]]
  %s52 = scalar_lea.smem %s0, 26
  %s53 = sld [smem:[%s52]]
  %s54 = scalar_lea.smem %s0, 27
  %s55 = sld [smem:[%s54]]
  %s56 = scalar_lea.smem %s0, 28
  %s57 = sld [smem:[%s56]]
  %s58 = scalar_lea.smem %s0, 29
  %s59 = sld [smem:[%s58]]
  %s60 = scalar_lea.smem %s0, 30
  %s61 = sld [smem:[%s60]]
  %s62 = scalar_lea.smem %s0, 31
  %s63 = sld [smem:[%s62]]
  %s64 = sld [smem:[#allocation0]]
  $region134: #{emg_transformer_forward.1} parent=0
    _
  %s66 = ssub.s32 1, %s64
  %s67 = scalar_select 0, %s66, %s64
  $region1: #{emg_transformer_forward.1} parent=0
    #allocation2 [shape = 'u8[1024]{0}', space=vmem, size = 0x400, scoped, tag = 'output window, operand 0, single buffered']
    #allocation3 [shape = 's32[1]{0}', space=sflag, size = 0x4, scoped, tag = 'scoped memory for emg_transformer_forward.1']
    %68 = vsyncpa [#allocation3], 0
    // Predicated region
    $region2: #{emg_transformer_forward.1} parent=1 // pred_check
      _
    $region3: #{emg_transformer_forward.1} parent=1 // pred_check_branch
      %70 = sbr.rel (0) target = $region5
    $region4: #{emg_transformer_forward.1} parent=1 // pred_region
      _
    $region5: #{emg_transformer_forward.1} parent=1 // pred_fallthru
      _
    // Predicated region
    $region6: #{emg_transformer_forward.1} parent=1 // pred_check
      _
    $region7: #{emg_transformer_forward.1} parent=1 // pred_check_branch
      %72 = sbr.rel (0) target = $region9
    $region8: #{emg_transformer_forward.1} parent=1 // pred_region
      _
    $region9: #{emg_transformer_forward.1} parent=1 // pred_fallthru
      _
    // Predicated region
    $region10: #{emg_transformer_forward.1} parent=1 // pred_check
      _
    $region11: #{emg_transformer_forward.1} parent=1 // pred_check_branch
      %74 = sbr.rel (0) target = $region13
    $region12: #{emg_transformer_forward.1} parent=1 // pred_region
      _
    $region13: #{emg_transformer_forward.1} parent=1 // pred_fallthru
      _
    // Predicated region
    $region14: #{emg_transformer_forward.1} parent=1 // pred_check
      _
    $region15: #{emg_transformer_forward.1} parent=1 // pred_check_branch
      %76 = sbr.rel (0) target = $region17
    $region16: #{emg_transformer_forward.1} parent=1 // pred_region
      _
    $region17: #{emg_transformer_forward.1} parent=1 // pred_fallthru
      _
    // Predicated region
    $region18: #{emg_transformer_forward.1} parent=1 // pred_check
      _
    $region19: #{emg_transformer_forward.1} parent=1 // pred_check_branch
      %78 = sbr.rel (0) target = $region21
    $region20: #{emg_transformer_forward.1} parent=1 // pred_region
      _
    $region21: #{emg_transformer_forward.1} parent=1 // pred_fallthru
      _
    // Predicated region
    $region22: #{emg_transformer_forward.1} parent=1 // pred_check
      _
    $region23: #{emg_transformer_forward.1} parent=1 // pred_check_branch
      %80 = sbr.rel (0) target = $region25
    $region24: #{emg_transformer_forward.1} parent=1 // pred_region
      _
    $region25: #{emg_transformer_forward.1} parent=1 // pred_fallthru
      _
    // Predicated region
    $region26: #{emg_transformer_forward.1} parent=1 // pred_check
      _
    $region27: #{emg_transformer_forward.1} parent=1 // pred_check_branch
      %82 = sbr.rel (0) target = $region29
    $region28: #{emg_transformer_forward.1} parent=1 // pred_region
      _
    $region29: #{emg_transformer_forward.1} parent=1 // pred_fallthru
      _
    // Predicated region
    $region30: #{emg_transformer_forward.1} parent=1 // pred_check
      _
    $region31: #{emg_transformer_forward.1} parent=1 // pred_check_branch
      %84 = sbr.rel (0) target = $region33
    $region32: #{emg_transformer_forward.1} parent=1 // pred_region
      _
    $region33: #{emg_transformer_forward.1} parent=1 // pred_fallthru
      _
    // Predicated region
    $region34: #{emg_transformer_forward.1} parent=1 // pred_check
      _
    $region35: #{emg_transformer_forward.1} parent=1 // pred_check_branch
      %86 = sbr.rel (0) target = $region37
    $region36: #{emg_transformer_forward.1} parent=1 // pred_region
      _
    $region37: #{emg_transformer_forward.1} parent=1 // pred_fallthru
      _
    // Predicated region
    $region38: #{emg_transformer_forward.1} parent=1 // pred_check
      _
    $region39: #{emg_transformer_forward.1} parent=1 // pred_check_branch
      %88 = sbr.rel (0) target = $region41
    $region40: #{emg_transformer_forward.1} parent=1 // pred_region
      _
    $region41: #{emg_transformer_forward.1} parent=1 // pred_fallthru
      _
    // Predicated region
    $region42: #{emg_transformer_forward.1} parent=1 // pred_check
      _
    $region43: #{emg_transformer_forward.1} parent=1 // pred_check_branch
      %90 = sbr.rel (0) target = $region45
    $region44: #{emg_transformer_forward.1} parent=1 // pred_region
      _
    $region45: #{emg_transformer_forward.1} parent=1 // pred_fallthru
      _
    // Predicated region
    $region46: #{emg_transformer_forward.1} parent=1 // pred_check
      _
    $region47: #{emg_transformer_forward.1} parent=1 // pred_check_branch
      %92 = sbr.rel (0) target = $region49
    $region48: #{emg_transformer_forward.1} parent=1 // pred_region
      _
    $region49: #{emg_transformer_forward.1} parent=1 // pred_fallthru
      _
    // Predicated region
    $region50: #{emg_transformer_forward.1} parent=1 // pred_check
      _
    $region51: #{emg_transformer_forward.1} parent=1 // pred_check_branch
      %94 = sbr.rel (0) target = $region53
    $region52: #{emg_transformer_forward.1} parent=1 // pred_region
      _
    $region53: #{emg_transformer_forward.1} parent=1 // pred_fallthru
      _
    // Predicated region
    $region54: #{emg_transformer_forward.1} parent=1 // pred_check
      _
    $region55: #{emg_transformer_forward.1} parent=1 // pred_check_branch
      %96 = sbr.rel (0) target = $region57
    $region56: #{emg_transformer_forward.1} parent=1 // pred_region
      _
    $region57: #{emg_transformer_forward.1} parent=1 // pred_fallthru
      _
    // Predicated region
    $region58: #{emg_transformer_forward.1} parent=1 // pred_check
      _
    $region59: #{emg_transformer_forward.1} parent=1 // pred_check_branch
      %98 = sbr.rel (0) target = $region61
    $region60: #{emg_transformer_forward.1} parent=1 // pred_region
      _
    $region61: #{emg_transformer_forward.1} parent=1 // pred_fallthru
      _
    // Predicated region
    $region62: #{emg_transformer_forward.1} parent=1 // pred_check
      _
    $region63: #{emg_transformer_forward.1} parent=1 // pred_check_branch
      %100 = sbr.rel (0) target = $region65
    $region64: #{emg_transformer_forward.1} parent=1 // pred_region
      _
    $region65: #{emg_transformer_forward.1} parent=1 // pred_fallthru
      _
    // Predicated region
    $region66: #{emg_transformer_forward.1} parent=1 // pred_check
      _
    $region67: #{emg_transformer_forward.1} parent=1 // pred_check_branch
      %102 = sbr.rel (0) target = $region69
    $region68: #{emg_transformer_forward.1} parent=1 // pred_region
      _
    $region69: #{emg_transformer_forward.1} parent=1 // pred_fallthru
      _
    // Predicated region
    $region70: #{emg_transformer_forward.1} parent=1 // pred_check
      _
    $region71: #{emg_transformer_forward.1} parent=1 // pred_check_branch
      %104 = sbr.rel (0) target = $region73
    $region72: #{emg_transformer_forward.1} parent=1 // pred_region
      _
    $region73: #{emg_transformer_forward.1} parent=1 // pred_fallthru
      _
    // Predicated region
    $region74: #{emg_transformer_forward.1} parent=1 // pred_check
      _
    $region75: #{emg_transformer_forward.1} parent=1 // pred_check_branch
      %106 = sbr.rel (0) target = $region77
    $region76: #{emg_transformer_forward.1} parent=1 // pred_region
      _
    $region77: #{emg_transformer_forward.1} parent=1 // pred_fallthru
      _
    // Predicated region
    $region78: #{emg_transformer_forward.1} parent=1 // pred_check
      _
    $region79: #{emg_transformer_forward.1} parent=1 // pred_check_branch
      %108 = sbr.rel (0) target = $region81
    $region80: #{emg_transformer_forward.1} parent=1 // pred_region
      _
    $region81: #{emg_transformer_forward.1} parent=1 // pred_fallthru
      _
    // Predicated region
    $region82: #{emg_transformer_forward.1} parent=1 // pred_check
      _
    $region83: #{emg_transformer_forward.1} parent=1 // pred_check_branch
      %110 = sbr.rel (0) target = $region85
    $region84: #{emg_transformer_forward.1} parent=1 // pred_region
      _
    $region85: #{emg_transformer_forward.1} parent=1 // pred_fallthru
      _
    // Predicated region
    $region86: #{emg_transformer_forward.1} parent=1 // pred_check
      _
    $region87: #{emg_transformer_forward.1} parent=1 // pred_check_branch
      %112 = sbr.rel (0) target = $region89
    $region88: #{emg_transformer_forward.1} parent=1 // pred_region
      _
    $region89: #{emg_transformer_forward.1} parent=1 // pred_fallthru
      _
    // Predicated region
    $region90: #{emg_transformer_forward.1} parent=1 // pred_check
      _
    $region91: #{emg_transformer_forward.1} parent=1 // pred_check_branch
      %114 = sbr.rel (0) target = $region93
    $region92: #{emg_transformer_forward.1} parent=1 // pred_region
      _
    $region93: #{emg_transformer_forward.1} parent=1 // pred_fallthru
      _
    // Predicated region
    $region94: #{emg_transformer_forward.1} parent=1 // pred_check
      _
    $region95: #{emg_transformer_forward.1} parent=1 // pred_check_branch
      %116 = sbr.rel (0) target = $region97
    $region96: #{emg_transformer_forward.1} parent=1 // pred_region
      _
    $region97: #{emg_transformer_forward.1} parent=1 // pred_fallthru
      _
    // Predicated region
    $region98: #{emg_transformer_forward.1} parent=1 // pred_check
      _
    $region99: #{emg_transformer_forward.1} parent=1 // pred_check_branch
      %118 = sbr.rel (0) target = $region101
    $region100: #{emg_transformer_forward.1} parent=1 // pred_region
      _
    $region101: #{emg_transformer_forward.1} parent=1 // pred_fallthru
      _
    // Predicated region
    $region102: #{emg_transformer_forward.1} parent=1 // pred_check
      _
    $region103: #{emg_transformer_forward.1} parent=1 // pred_check_branch
      %120 = sbr.rel (0) target = $region105
    $region104: #{emg_transformer_forward.1} parent=1 // pred_region
      _
    $region105: #{emg_transformer_forward.1} parent=1 // pred_fallthru
      _
    // Predicated region
    $region106: #{emg_transformer_forward.1} parent=1 // pred_check
      _
    $region107: #{emg_transformer_forward.1} parent=1 // pred_check_branch
      %122 = sbr.rel (0) target = $region109
    $region108: #{emg_transformer_forward.1} parent=1 // pred_region
      _
    $region109: #{emg_transformer_forward.1} parent=1 // pred_fallthru
      _
    // Predicated region
    $region110: #{emg_transformer_forward.1} parent=1 // pred_check
      _
    $region111: #{emg_transformer_forward.1} parent=1 // pred_check_branch
      %124 = sbr.rel (0) target = $region113
    $region112: #{emg_transformer_forward.1} parent=1 // pred_region
      _
    $region113: #{emg_transformer_forward.1} parent=1 // pred_fallthru
      _
    // Predicated region
    $region114: #{emg_transformer_forward.1} parent=1 // pred_check
      _
    $region115: #{emg_transformer_forward.1} parent=1 // pred_check_branch
      %126 = sbr.rel (0) target = $region117
    $region116: #{emg_transformer_forward.1} parent=1 // pred_region
      _
    $region117: #{emg_transformer_forward.1} parent=1 // pred_fallthru
      _
    // Predicated region
    $region118: #{emg_transformer_forward.1} parent=1 // pred_check
      _
    $region119: #{emg_transformer_forward.1} parent=1 // pred_check_branch
      %128 = sbr.rel (0) target = $region121
    $region120: #{emg_transformer_forward.1} parent=1 // pred_region
      _
    $region121: #{emg_transformer_forward.1} parent=1 // pred_fallthru
      _
    // Predicated region
    $region122: #{emg_transformer_forward.1} parent=1 // pred_check
      _
    $region123: #{emg_transformer_forward.1} parent=1 // pred_check_branch
      %130 = sbr.rel (0) target = $region125
    $region124: #{emg_transformer_forward.1} parent=1 // pred_region
      _
    $region125: #{emg_transformer_forward.1} parent=1 // pred_fallthru
      _
    %v132 = vld [vmem:[%s1] sm:$0xff]
    %v133 = vld [vmem:[%s1 + $0x8] sm:$0xff]
    %v134 = vld [vmem:[%s3] sm:$0xff]
    %v135 = vld [vmem:[%s3 + $0x8] sm:$0xff]
    %v136 = vld [vmem:[%s5] sm:$0xff]
    %v137 = vld [vmem:[%s5 + $0x8] sm:$0xff]
    %v138 = vld [vmem:[%s5 + $0x10] sm:$0xff]
    %v139 = vld [vmem:[%s5 + $0x18] sm:$0xff]
    %v140 = vld [vmem:[%s5 + $0x20] sm:$0xff]
    %v141 = vld [vmem:[%s5 + $0x28] sm:$0xff]
    %v142 = vld [vmem:[%s5 + $0x30] sm:$0xff]
    %v143 = vld [vmem:[%s5 + $0x38] sm:$0xff]
    %v144 = vld [vmem:[%s7] sm:$0xf]
    %v145 = vld [vmem:[%s7 + $0x4] sm:$0xf]
    %v146 = vld [vmem:[%s7 + $0x8] sm:$0xf]
    %v147 = vld [vmem:[%s7 + $0xc] sm:$0xf]
    %v148 = vld [vmem:[%s7 + $0x10] sm:$0xf]
    %v149 = vld [vmem:[%s7 + $0x14] sm:$0xf]
    %v150 = vld [vmem:[%s7 + $0x18] sm:$0xf]
    %v151 = vld [vmem:[%s7 + $0x1c] sm:$0xf]
    %v152 = vpack.c.bf16 %v133, %v132
    %v153 = vld [vmem:[%s11] sm:$0xff]
    %v154 = vld [vmem:[%s11 + $0x8] sm:$0xff]
    %v155 = vld [vmem:[%s11 + $0x10] sm:$0xff]
    %v156 = vld [vmem:[%s11 + $0x18] sm:$0xff]
    %v157 = vld [vmem:[%s11 + $0x20] sm:$0xff]
    %v158 = vld [vmem:[%s11 + $0x28] sm:$0xff]
    %v159 = vld [vmem:[%s11 + $0x30] sm:$0xff]
    %v160 = vld [vmem:[%s11 + $0x38] sm:$0xff]
    %v161 = vld [vmem:[%s13] sm:$0x3]
    %v163 = vlaneseq
    %v164 = vshrl.u32 %v163, 7
    %v165 = vsub.s32 0, %v164
    %v166 = vrot.slane %v161, %v165
    %v167 = vlaneseq
    %v168 = vshrl.u32 %v167, 7
    %v169 = vsub.s32 1, %v168
    %v170 = vrot.slane %v161, %v169
    %v181 = vunpack.c.l.b16 %v153
    %v182 = vunpack.c.h.b16 %v153
    %v183 = vunpack.c.l.b16 %v154
    %v184 = vunpack.c.h.b16 %v154
    %v185 = vunpack.c.l.b16 %v155
    %v186 = vunpack.c.h.b16 %v155
    %v187 = vunpack.c.l.b16 %v156
    %v188 = vunpack.c.h.b16 %v156
    %v189 = vunpack.c.l.b16 %v157
    %v190 = vunpack.c.h.b16 %v157
    %v191 = vunpack.c.l.b16 %v158
    %v192 = vunpack.c.h.b16 %v158
    %v193 = vunpack.c.l.b16 %v159
    %v194 = vunpack.c.h.b16 %v159
    %v195 = vunpack.c.l.b16 %v160
    %v196 = vunpack.c.h.b16 %v160
    %v197 = vpack.c.b16 %v183, %v181
    %v198 = vpack.c.b16 %v184, %v182
    %v199 = vpack.c.b16 %v187, %v185
    %v200 = vpack.c.b16 %v188, %v186
    %v201 = vpack.c.b16 %v191, %v189
    %v202 = vpack.c.b16 %v192, %v190
    %v203 = vpack.c.b16 %v195, %v193
    %v204 = vpack.c.b16 %v196, %v194
    %vm213 = vcmask 523264
    %v215 = vsel %vm213, %v152, 0
    %217 = vmatprep.subr.bf16.mxu0 0
    %218 = vmatpush1.bf16.msra.mxu0 0
    %219 = vmatprep.subr.bf16.mxu0 0
    %220 = vmatpush1.bf16.msra.mxu0 0
    %221 = vmatprep.subr.bf16.mxu0 0
    %222 = vmatpush1.bf16.msra.mxu0 0
    %223 = vmatprep.subr.bf16.mxu0 0
    %224 = vmatpush1.bf16.msra.mxu0 0
    %225 = vmatprep.subr.bf16.mxu0 %v204
    %226 = vmatpush1.bf16.msra.mxu0 %v203
    %227 = vmatprep.subr.bf16.mxu0 %v202
    %228 = vmatpush1.bf16.msra.mxu0 %v201
    %229 = vmatprep.subr.bf16.mxu0 %v200
    %230 = vmatpush1.bf16.msra.mxu0 %v199
    %231 = vmatprep.subr.bf16.mxu0 %v198
    %232 = vmatpush1.bf16.msra.mxu0 %v197
    %233 = vmatprep.subr.bf16.mxu0 0
    %234 = vmatpush2.bf16.msra.mxu0 0
    %235 = vmatprep.subr.bf16.mxu0 0
    %236 = vmatpush2.bf16.msra.mxu0 0
    %237 = vmatprep.subr.bf16.mxu0 0
    %238 = vmatpush2.bf16.msra.mxu0 0
    %239 = vmatprep.subr.bf16.mxu0 0
    %240 = vmatpush2.bf16.msra.mxu0 0
    %241 = vmatprep.subr.bf16.mxu0 0
    %242 = vmatpush2.bf16.msra.mxu0 0
    %243 = vmatprep.subr.bf16.mxu0 0
    %244 = vmatpush2.bf16.msra.mxu0 0
    %245 = vmatprep.subr.bf16.mxu0 0
    %246 = vmatpush2.bf16.msra.mxu0 0
    %247 = vmatprep.subr.bf16.mxu0 0
    %248 = vmatpush2.bf16.msra.mxu0 0
    %249 = vmatprep.mubr.bf16.mxu0 0
    %250 = vmatmul.mubr.bf16.gmra.mxu0 %v215
    %v251 = vpop.f32.mrf.mxu0
    %v252 = vadd.f32 %v166, %v251
    %v253 = vpop.f32.mrf.mxu0
    %v254 = vadd.f32 %v170, %v253
    %v255 = vpop.f32.mrf.mxu0
    %v256 = vadd.f32 %v166, %v255
    %v257 = vpop.f32.mrf.mxu0
    %v258 = vadd.f32 %v170, %v257
    %259 = vdwg.mxu0
    %268 = vrot.lane.b32.xlu0 %v136, 64
    %v269 = vpop.permute.xlu0 %268
    %270 = vrot.lane.b32.xlu0 %v137, 64
    %v271 = vpop.permute.xlu0 %270
    %272 = vrot.lane.b32.xlu0 %v138, 64
    %v273 = vpop.permute.xlu0 %272
    %274 = vrot.lane.b32.xlu0 %v139, 64
    %v275 = vpop.permute.xlu0 %274
    %276 = vrot.lane.b32.xlu0 %v140, 64
    %v277 = vpop.permute.xlu0 %276
    %278 = vrot.lane.b32.xlu0 %v141, 64
    %v279 = vpop.permute.xlu0 %278
    %280 = vrot.lane.b32.xlu0 %v142, 64
    %v281 = vpop.permute.xlu0 %280
    %282 = vrot.lane.b32.xlu0 %v143, 64
    %v283 = vpop.permute.xlu0 %282
    %v292 = vmul.f32 %v252, %v269
    %v293 = vmul.f32 %v252, %v271
    %v294 = vmul.f32 %v252, %v273
    %v295 = vmul.f32 %v252, %v275
    %v296 = vmul.f32 %v252, %v277
    %v297 = vmul.f32 %v252, %v279
    %v298 = vmul.f32 %v252, %v281
    %v299 = vmul.f32 %v252, %v283
    %v300 = vmul.f32 %v256, %v269
    %v301 = vmul.f32 %v256, %v271
    %v302 = vmul.f32 %v256, %v273
    %v303 = vmul.f32 %v256, %v275
    %v304 = vmul.f32 %v256, %v277
    %v305 = vmul.f32 %v256, %v279
    %v306 = vmul.f32 %v256, %v281
    %v307 = vmul.f32 %v256, %v283
    %v308 = vmul.f32 %v254, %v136
    %v309 = vmul.f32 %v254, %v137
    %v310 = vmul.f32 %v254, %v138
    %v311 = vmul.f32 %v254, %v139
    %v312 = vmul.f32 %v254, %v140
    %v313 = vmul.f32 %v254, %v141
    %v314 = vmul.f32 %v254, %v142
    %v315 = vmul.f32 %v254, %v143
    %v316 = vmul.f32 %v258, %v136
    %v317 = vmul.f32 %v258, %v137
    %v318 = vmul.f32 %v258, %v138
    %v319 = vmul.f32 %v258, %v139
    %v320 = vmul.f32 %v258, %v140
    %v321 = vmul.f32 %v258, %v141
    %v322 = vmul.f32 %v258, %v142
    %v323 = vmul.f32 %v258, %v143
    %v324 = vpack.c.bf16 %v252, %v252
    %v325 = vpack.c.bf16 %v256, %v256
    %v326 = vpack.c.bf16 %v293, %v292
    %v327 = vpack.c.bf16 %v295, %v294
    %v328 = vpack.c.bf16 %v297, %v296
    %v329 = vpack.c.bf16 %v299, %v298
    %v330 = vpack.c.bf16 %v301, %v300
    %v331 = vpack.c.bf16 %v303, %v302
    %v332 = vpack.c.bf16 %v305, %v304
    %v333 = vpack.c.bf16 %v307, %v306
    %338 = vrot.lane.b32.xlu0 %v326, 64
    %v339 = vpop.permute.xlu0 %338
    %340 = vrot.lane.b32.xlu0 %v327, 64
    %v341 = vpop.permute.xlu0 %340
    %342 = vrot.lane.b32.xlu0 %v328, 64
    %v343 = vpop.permute.xlu0 %342
    %344 = vrot.lane.b32.xlu0 %v329, 64
    %v345 = vpop.permute.xlu0 %344
    %v347 = vsel %vm213, %v324, 0
    %v350 = vsel %vm213, %v339, 0
    %v353 = vsel %vm213, %v341, 0
    %v356 = vsel %vm213, %v343, 0
    %v359 = vsel %vm213, %v345, 0
    %361 = vmatprep.subr.bf16.mxu0 0
    %362 = vmatpush1.bf16.xpose.msra.mxu0 0
    %363 = vmatprep.subr.bf16.mxu0 0
    %364 = vmatpush1.bf16.xpose.msra.mxu0 0
    %365 = vmatprep.subr.bf16.mxu0 0
    %366 = vmatpush1.bf16.xpose.msra.mxu0 0
    %367 = vmatprep.subr.bf16.mxu0 0
    %368 = vmatpush1.bf16.xpose.msra.mxu0 0
    %369 = vmatprep.subr.bf16.mxu0 0
    %370 = vmatpush1.bf16.xpose.msra.mxu0 %v359
    %371 = vmatprep.subr.bf16.mxu0 0
    %372 = vmatpush1.bf16.xpose.msra.mxu0 %v356
    %373 = vmatprep.subr.bf16.mxu0 0
    %374 = vmatpush1.bf16.xpose.msra.mxu0 %v353
    %375 = vmatprep.subr.bf16.mxu0 0
    %376 = vmatpush1.bf16.xpose.msra.mxu0 %v350
    %377 = vmatprep.subr.bf16.mxu0 0
    %378 = vmatpush2.bf16.xpose.msra.mxu0 0
    %379 = vmatprep.subr.bf16.mxu0 0
    %380 = vmatpush2.bf16.xpose.msra.mxu0 0
    %381 = vmatprep.subr.bf16.mxu0 0
    %382 = vmatpush2.bf16.xpose.msra.mxu0 0
    %383 = vmatprep.subr.bf16.mxu0 0
    %384 = vmatpush2.bf16.xpose.msra.mxu0 0
    %385 = vmatprep.subr.bf16.mxu0 0
    %386 = vmatpush2.bf16.xpose.msra.mxu0 0
    %387 = vmatprep.subr.bf16.mxu0 0
    %388 = vmatpush2.bf16.xpose.msra.mxu0 0
    %389 = vmatprep.subr.bf16.mxu0 0
    %390 = vmatpush2.bf16.xpose.msra.mxu0 0
    %391 = vmatprep.subr.bf16.mxu0 0
    %392 = vmatpush2.bf16.xpose.msra.mxu0 0
    %393 = vmatprep.mubr.bf16.mxu0 0
    %394 = vmatmul.mubr.bf16.gmra.mxu0 %v347
    %v395 = vpop.f32.mrf.mxu0
    %v396 = vadd.f32 %v134, %v395
    %v397 = vpop.f32.mrf.mxu0
    %v398 = vpop.f32.mrf.mxu0
    %v399 = vpop.f32.mrf.mxu0
    %400 = vdwg.mxu0
    %405 = vrot.lane.b32.xlu0 %v330, 64
    %v406 = vpop.permute.xlu0 %405
    %407 = vrot.lane.b32.xlu0 %v331, 64
    %v408 = vpop.permute.xlu0 %407
    %409 = vrot.lane.b32.xlu0 %v332, 64
    %v410 = vpop.permute.xlu0 %409
    %411 = vrot.lane.b32.xlu0 %v333, 64
    %v412 = vpop.permute.xlu0 %411
    %v414 = vsel %vm213, %v325, 0
    %v417 = vsel %vm213, %v406, 0
    %v420 = vsel %vm213, %v408, 0
    %v423 = vsel %vm213, %v410, 0
    %v426 = vsel %vm213, %v412, 0
    %428 = vmatprep.subr.bf16.mxu0 0
    %429 = vmatpush1.bf16.xpose.msra.mxu0 0
    %430 = vmatprep.subr.bf16.mxu0 0
    %431 = vmatpush1.bf16.xpose.msra.mxu0 0
    %432 = vmatprep.subr.bf16.mxu0 0
    %433 = vmatpush1.bf16.xpose.msra.mxu0 0
    %434 = vmatprep.subr.bf16.mxu0 0
    %435 = vmatpush1.bf16.xpose.msra.mxu0 0
    %436 = vmatprep.subr.bf16.mxu0 0
    %437 = vmatpush1.bf16.xpose.msra.mxu0 %v426
    %438 = vmatprep.subr.bf16.mxu0 0
    %439 = vmatpush1.bf16.xpose.msra.mxu0 %v423
    %440 = vmatprep.subr.bf16.mxu0 0
    %441 = vmatpush1.bf16.xpose.msra.mxu0 %v420
    %442 = vmatprep.subr.bf16.mxu0 0
    %443 = vmatpush1.bf16.xpose.msra.mxu0 %v417
    %444 = vmatprep.subr.bf16.mxu0 0
    %445 = vmatpush2.bf16.xpose.msra.mxu0 0
    %446 = vmatprep.subr.bf16.mxu0 0
    %447 = vmatpush2.bf16.xpose.msra.mxu0 0
    %448 = vmatprep.subr.bf16.mxu0 0
    %449 = vmatpush2.bf16.xpose.msra.mxu0 0
    %450 = vmatprep.subr.bf16.mxu0 0
    %451 = vmatpush2.bf16.xpose.msra.mxu0 0
    %452 = vmatprep.subr.bf16.mxu0 0
    %453 = vmatpush2.bf16.xpose.msra.mxu0 0
    %454 = vmatprep.subr.bf16.mxu0 0
    %455 = vmatpush2.bf16.xpose.msra.mxu0 0
    %456 = vmatprep.subr.bf16.mxu0 0
    %457 = vmatpush2.bf16.xpose.msra.mxu0 0
    %458 = vmatprep.subr.bf16.mxu0 0
    %459 = vmatpush2.bf16.xpose.msra.mxu0 0
    %460 = vmatprep.mubr.bf16.mxu0 0
    %461 = vmatmul.mubr.bf16.gmra.mxu0 %v414
    %v462 = vpop.f32.mrf.mxu0
    %v463 = vadd.f32 %v135, %v462
    %v464 = vpop.f32.mrf.mxu0
    %v465 = vpop.f32.mrf.mxu0
    %v466 = vpop.f32.mrf.mxu0
    %467 = vdwg.mxu0
    %v468 = vsel %vm213, %v396, -inf
    %469 = vmax.xlane.f32.xlu0 %v468
    %v470 = vpop.xlane.xlu0 %469
    %v471 = vsel %vm213, %v463, -inf
    %472 = vmax.xlane.f32.xlu0 %v471
    %v473 = vpop.xlane.xlu0 %472
    %v474 = vsub.f32 %v396, %v470
    %v475 = vsub.f32 %v463, %v473
    %v476 = vmul.f32 %v474, 1.442695
    %v477 = vpow.pop %v476
    %v478 = vmul.f32 %v475, 1.442695
    %v479 = vpow.pop %v478
    %v480 = vpack.c.bf16 %v479, %v477
    %v489 = vunpack.c.l.b16 %v144
    %v490 = vunpack.c.l.b16 %v145
    %v491 = vunpack.c.l.b16 %v146
    %v492 = vunpack.c.l.b16 %v147
    %v493 = vunpack.c.l.b16 %v148
    %v494 = vunpack.c.l.b16 %v149
    %v495 = vunpack.c.l.b16 %v150
    %v496 = vunpack.c.l.b16 %v151
    %v497 = vpack.c.b16 %v490, %v489
    %v498 = vpack.c.b16 %v492, %v491
    %v499 = vpack.c.b16 %v494, %v493
    %v500 = vpack.c.b16 %v496, %v495
    %v506 = vsel %vm213, %v480, 0
    %508 = vmatprep.subr.bf16.mxu0 0
    %509 = vmatpush1.bf16.msra.mxu0 0
    %510 = vmatprep.subr.bf16.mxu0 0
    %511 = vmatpush1.bf16.msra.mxu0 0
    %512 = vmatprep.subr.bf16.mxu0 0
    %513 = vmatpush1.bf16.msra.mxu0 0
    %514 = vmatprep.subr.bf16.mxu0 0
    %515 = vmatpush1.bf16.msra.mxu0 0
    %516 = vmatprep.subr.bf16.mxu0 0
    %517 = vmatpush1.bf16.msra.mxu0 %v500
    %518 = vmatprep.subr.bf16.mxu0 0
    %519 = vmatpush1.bf16.msra.mxu0 %v499
    %520 = vmatprep.subr.bf16.mxu0 0
    %521 = vmatpush1.bf16.msra.mxu0 %v498
    %522 = vmatprep.subr.bf16.mxu0 0
    %523 = vmatpush1.bf16.msra.mxu0 %v497
    %524 = vmatprep.subr.bf16.mxu0 0
    %525 = vmatpush2.bf16.msra.mxu0 0
    %526 = vmatprep.subr.bf16.mxu0 0
    %527 = vmatpush2.bf16.msra.mxu0 0
    %528 = vmatprep.subr.bf16.mxu0 0
    %529 = vmatpush2.bf16.msra.mxu0 0
    %530 = vmatprep.subr.bf16.mxu0 0
    %531 = vmatpush2.bf16.msra.mxu0 0
    %532 = vmatprep.subr.bf16.mxu0 0
    %533 = vmatpush2.bf16.msra.mxu0 0
    %534 = vmatprep.subr.bf16.mxu0 0
    %535 = vmatpush2.bf16.msra.mxu0 0
    %536 = vmatprep.subr.bf16.mxu0 0
    %537 = vmatpush2.bf16.msra.mxu0 0
    %538 = vmatprep.subr.bf16.mxu0 0
    %539 = vmatpush2.bf16.msra.mxu0 0
    %540 = vmatprep.mubr.bf16.mxu0 0
    %541 = vmatmul.mubr.bf16.gmra.mxu0 %v506
    %v542 = vpop.f32.mrf.mxu0
    %v543 = vadd.f32 0.0, %v542
    %v544 = vpop.f32.mrf.mxu0
    %v545 = vpop.f32.mrf.mxu0
    %v546 = vadd.f32 0.0, %v545
    %v547 = vpop.f32.mrf.mxu0
    %548 = vdwg.mxu0
    %v549 = vrcp.pop %v543
    %v550 = vrcp.pop %v546
    %v551 = vmul.f32 %v477, %v549
    %v552 = vmul.f32 %v479, %v550
    %v553 = vpack.c.bf16 %v551, %v551
    %v554 = vpack.c.bf16 %v552, %v552
    %v555 = vpack.c.bf16 %v309, %v308
    %v556 = vpack.c.bf16 %v311, %v310
    %v557 = vpack.c.bf16 %v313, %v312
    %v558 = vpack.c.bf16 %v315, %v314
    %v559 = vpack.c.bf16 %v317, %v316
    %v560 = vpack.c.bf16 %v319, %v318
    %v561 = vpack.c.bf16 %v321, %v320
    %v562 = vpack.c.bf16 %v323, %v322
    %v564 = vsel %vm213, %v553, 0
    %566 = vmatprep.subr.bf16.mxu0 0
    %567 = vmatpush1.bf16.msra.mxu0 0
    %568 = vmatprep.subr.bf16.mxu0 0
    %569 = vmatpush1.bf16.msra.mxu0 0
    %570 = vmatprep.subr.bf16.mxu0 0
    %571 = vmatpush1.bf16.msra.mxu0 0
    %572 = vmatprep.subr.bf16.mxu0 0
    %573 = vmatpush1.bf16.msra.mxu0 0
    %574 = vmatprep.subr.bf16.mxu0 0
    %575 = vmatpush1.bf16.msra.mxu0 %v558
    %576 = vmatprep.subr.bf16.mxu0 0
    %577 = vmatpush1.bf16.msra.mxu0 %v557
    %578 = vmatprep.subr.bf16.mxu0 0
    %579 = vmatpush1.bf16.msra.mxu0 %v556
    %580 = vmatprep.subr.bf16.mxu0 0
    %581 = vmatpush1.bf16.msra.mxu0 %v555
    %582 = vmatprep.subr.bf16.mxu0 0
    %583 = vmatpush2.bf16.msra.mxu0 0
    %584 = vmatprep.subr.bf16.mxu0 0
    %585 = vmatpush2.bf16.msra.mxu0 0
    %586 = vmatprep.subr.bf16.mxu0 0
    %587 = vmatpush2.bf16.msra.mxu0 0
    %588 = vmatprep.subr.bf16.mxu0 0
    %589 = vmatpush2.bf16.msra.mxu0 0
    %590 = vmatprep.subr.bf16.mxu0 0
    %591 = vmatpush2.bf16.msra.mxu0 0
    %592 = vmatprep.subr.bf16.mxu0 0
    %593 = vmatpush2.bf16.msra.mxu0 0
    %594 = vmatprep.subr.bf16.mxu0 0
    %595 = vmatpush2.bf16.msra.mxu0 0
    %596 = vmatprep.subr.bf16.mxu0 0
    %597 = vmatpush2.bf16.msra.mxu0 0
    %598 = vmatprep.mubr.bf16.mxu0 0
    %599 = vmatmul.mubr.bf16.gmra.mxu0 %v564
    %v600 = vpop.f32.mrf.mxu0
    %v601 = vadd.f32 0.0, %v600
    %v602 = vpop.f32.mrf.mxu0
    %v603 = vpop.f32.mrf.mxu0
    %v604 = vpop.f32.mrf.mxu0
    %605 = vdwg.mxu0
    %v607 = vsel %vm213, %v554, 0
    %609 = vmatprep.subr.bf16.mxu0 0
    %610 = vmatpush1.bf16.msra.mxu0 0
    %611 = vmatprep.subr.bf16.mxu0 0
    %612 = vmatpush1.bf16.msra.mxu0 0
    %613 = vmatprep.subr.bf16.mxu0 0
    %614 = vmatpush1.bf16.msra.mxu0 0
    %615 = vmatprep.subr.bf16.mxu0 0
    %616 = vmatpush1.bf16.msra.mxu0 0
    %617 = vmatprep.subr.bf16.mxu0 0
    %618 = vmatpush1.bf16.msra.mxu0 %v562
    %619 = vmatprep.subr.bf16.mxu0 0
    %620 = vmatpush1.bf16.msra.mxu0 %v561
    %621 = vmatprep.subr.bf16.mxu0 0
    %622 = vmatpush1.bf16.msra.mxu0 %v560
    %623 = vmatprep.subr.bf16.mxu0 0
    %624 = vmatpush1.bf16.msra.mxu0 %v559
    %625 = vmatprep.subr.bf16.mxu0 0
    %626 = vmatpush2.bf16.msra.mxu0 0
    %627 = vmatprep.subr.bf16.mxu0 0
    %628 = vmatpush2.bf16.msra.mxu0 0
    %629 = vmatprep.subr.bf16.mxu0 0
    %630 = vmatpush2.bf16.msra.mxu0 0
    %631 = vmatprep.subr.bf16.mxu0 0
    %632 = vmatpush2.bf16.msra.mxu0 0
    %633 = vmatprep.subr.bf16.mxu0 0
    %634 = vmatpush2.bf16.msra.mxu0 0
    %635 = vmatprep.subr.bf16.mxu0 0
    %636 = vmatpush2.bf16.msra.mxu0 0
    %637 = vmatprep.subr.bf16.mxu0 0
    %638 = vmatpush2.bf16.msra.mxu0 0
    %639 = vmatprep.subr.bf16.mxu0 0
    %640 = vmatpush2.bf16.msra.mxu0 0
    %641 = vmatprep.mubr.bf16.mxu0 0
    %642 = vmatmul.mubr.bf16.gmra.mxu0 %v607
    %v643 = vpop.f32.mrf.mxu0
    %v644 = vadd.f32 0.0, %v643
    %v645 = vpop.f32.mrf.mxu0
    %v646 = vpop.f32.mrf.mxu0
    %v647 = vpop.f32.mrf.mxu0
    %648 = vdwg.mxu0
    %v649 = vpack.c.bf16 %v644, %v601
    %v650 = vld [vmem:[%s15] sm:$0xf]
    %v651 = vld [vmem:[%s15 + $0x4] sm:$0xf]
    %v652 = vld [vmem:[%s15 + $0x8] sm:$0xf]
    %v653 = vld [vmem:[%s15 + $0xc] sm:$0xf]
    %v654 = vld [vmem:[%s15 + $0x10] sm:$0xf]
    %v655 = vld [vmem:[%s15 + $0x14] sm:$0xf]
    %v656 = vld [vmem:[%s15 + $0x18] sm:$0xf]
    %v657 = vld [vmem:[%s15 + $0x1c] sm:$0xf]
    %v658 = vld [vmem:[%s17] sm:$0x1]
    %v660 = vlaneseq
    %v661 = vshrl.u32 %v660, 7
    %v662 = vsub.s32 0, %v661
    %v663 = vrot.slane %v658, %v662
    %v673 = vunpack.c.l.b16 %v650
    %v674 = vunpack.c.l.b16 %v651
    %v675 = vunpack.c.l.b16 %v652
    %v676 = vunpack.c.l.b16 %v653
    %v677 = vunpack.c.l.b16 %v654
    %v678 = vunpack.c.l.b16 %v655
    %v679 = vunpack.c.l.b16 %v656
    %v680 = vunpack.c.l.b16 %v657
    %v681 = vpack.c.b16 %v674, %v673
    %v682 = vpack.c.b16 %v676, %v675
    %v683 = vpack.c.b16 %v678, %v677
    %v684 = vpack.c.b16 %v680, %v679
    %v690 = vsel %vm213, %v649, 0
    %692 = vmatprep.subr.bf16.mxu0 0
    %693 = vmatpush1.bf16.msra.mxu0 0
    %694 = vmatprep.subr.bf16.mxu0 0
    %695 = vmatpush1.bf16.msra.mxu0 0
    %696 = vmatprep.subr.bf16.mxu0 0
    %697 = vmatpush1.bf16.msra.mxu0 0
    %698 = vmatprep.subr.bf16.mxu0 0
    %699 = vmatpush1.bf16.msra.mxu0 0
    %700 = vmatprep.subr.bf16.mxu0 0
    %701 = vmatpush1.bf16.msra.mxu0 %v684
    %702 = vmatprep.subr.bf16.mxu0 0
    %703 = vmatpush1.bf16.msra.mxu0 %v683
    %704 = vmatprep.subr.bf16.mxu0 0
    %705 = vmatpush1.bf16.msra.mxu0 %v682
    %706 = vmatprep.subr.bf16.mxu0 0
    %707 = vmatpush1.bf16.msra.mxu0 %v681
    %708 = vmatprep.subr.bf16.mxu0 0
    %709 = vmatpush2.bf16.msra.mxu0 0
    %710 = vmatprep.subr.bf16.mxu0 0
    %711 = vmatpush2.bf16.msra.mxu0 0
    %712 = vmatprep.subr.bf16.mxu0 0
    %713 = vmatpush2.bf16.msra.mxu0 0
    %714 = vmatprep.subr.bf16.mxu0 0
    %715 = vmatpush2.bf16.msra.mxu0 0
    %716 = vmatprep.subr.bf16.mxu0 0
    %717 = vmatpush2.bf16.msra.mxu0 0
    %718 = vmatprep.subr.bf16.mxu0 0
    %719 = vmatpush2.bf16.msra.mxu0 0
    %720 = vmatprep.subr.bf16.mxu0 0
    %721 = vmatpush2.bf16.msra.mxu0 0
    %722 = vmatprep.subr.bf16.mxu0 0
    %723 = vmatpush2.bf16.msra.mxu0 0
    %724 = vmatprep.mubr.bf16.mxu0 0
    %725 = vmatmul.mubr.bf16.gmra.mxu0 %v690
    %v726 = vpop.f32.mrf.mxu0
    %v727 = vadd.f32 %v663, %v726
    %v728 = vpop.f32.mrf.mxu0
    %v729 = vpop.f32.mrf.mxu0
    %v730 = vadd.f32 %v663, %v729
    %v731 = vpop.f32.mrf.mxu0
    %732 = vdwg.mxu0
    %v733 = vadd.f32 %v132, %v727
    %v734 = vadd.f32 %v133, %v730
    %v735 = vld [vmem:[%s19] sm:$0x1]
    %v736 = vld [vmem:[%s21] sm:$0x1]
    %v737 = vsel %vm213, %v733, 0.0
    %738 = vadd.xlane.f32.xlu0 %v737
    %v739 = vpop.xlane.xlu0 %738
    %v740 = vsel %vm213, %v734, 0.0
    %741 = vadd.xlane.f32.xlu0 %v740
    %v742 = vpop.xlane.xlu0 %741
    %v743 = vrcp.pop 64.0
    %v744 = vmul.f32 %v739, %v743
    %v745 = vmul.f32 %v742, %v743
    %v746 = vsub.f32 %v733, %v744
    %v747 = vsub.f32 %v734, %v745
    %v748 = vmul.f32 %v746, %v746
    %v749 = vmul.f32 %v747, %v747
    %v750 = vsel %vm213, %v748, 0.0
    %751 = vadd.xlane.f32.xlu0 %v750
    %v752 = vpop.xlane.xlu0 %751
    %v753 = vsel %vm213, %v749, 0.0
    %754 = vadd.xlane.f32.xlu0 %v753
    %v755 = vpop.xlane.xlu0 %754
    %v756 = vmul.f32 %v752, %v743
    %v757 = vmul.f32 %v755, %v743
    %v758 = vadd.f32 %v756, 1e-05
    %v759 = vadd.f32 %v757, 1e-05
    %v760 = vrsqrt.pop %v758
    %v761 = vrsqrt.pop %v759
    %v762 = vmul.f32 %v746, %v760
    %v763 = vmul.f32 %v747, %v761
    %v765 = vlaneseq
    %v766 = vshrl.u32 %v765, 7
    %v767 = vsub.s32 0, %v766
    %v768 = vrot.slane %v735, %v767
    %v770 = vmul.f32 %v762, %v768
    %v771 = vmul.f32 %v763, %v768
    %v773 = vlaneseq
    %v774 = vshrl.u32 %v773, 7
    %v775 = vsub.s32 0, %v774
    %v776 = vrot.slane %v736, %v775
    %v778 = vadd.f32 %v770, %v776
    %v779 = vadd.f32 %v771, %v776
    %v780 = vpack.c.bf16 %v779, %v778
    %v781 = vld [vmem:[%s23] sm:$0xff]
    %v782 = vld [vmem:[%s23 + $0x8] sm:$0xff]
    %v783 = vld [vmem:[%s23 + $0x10] sm:$0xff]
    %v784 = vld [vmem:[%s23 + $0x18] sm:$0xff]
    %v785 = vld [vmem:[%s23 + $0x20] sm:$0xff]
    %v786 = vld [vmem:[%s23 + $0x28] sm:$0xff]
    %v787 = vld [vmem:[%s23 + $0x30] sm:$0xff]
    %v788 = vld [vmem:[%s23 + $0x38] sm:$0xff]
    %v789 = vld [vmem:[%s25] sm:$0x3]
    %v791 = vlaneseq
    %v792 = vshrl.u32 %v791, 7
    %v793 = vsub.s32 0, %v792
    %v794 = vrot.slane %v789, %v793
    %v795 = vlaneseq
    %v796 = vshrl.u32 %v795, 7
    %v797 = vsub.s32 1, %v796
    %v798 = vrot.slane %v789, %v797
    %v809 = vunpack.c.l.b16 %v781
    %v810 = vunpack.c.h.b16 %v781
    %v811 = vunpack.c.l.b16 %v782
    %v812 = vunpack.c.h.b16 %v782
    %v813 = vunpack.c.l.b16 %v783
    %v814 = vunpack.c.h.b16 %v783
    %v815 = vunpack.c.l.b16 %v784
    %v816 = vunpack.c.h.b16 %v784
    %v817 = vunpack.c.l.b16 %v785
    %v818 = vunpack.c.h.b16 %v785
    %v819 = vunpack.c.l.b16 %v786
    %v820 = vunpack.c.h.b16 %v786
    %v821 = vunpack.c.l.b16 %v787
    %v822 = vunpack.c.h.b16 %v787
    %v823 = vunpack.c.l.b16 %v788
    %v824 = vunpack.c.h.b16 %v788
    %v825 = vpack.c.b16 %v811, %v809
    %v826 = vpack.c.b16 %v812, %v810
    %v827 = vpack.c.b16 %v815, %v813
    %v828 = vpack.c.b16 %v816, %v814
    %v829 = vpack.c.b16 %v819, %v817
    %v830 = vpack.c.b16 %v820, %v818
    %v831 = vpack.c.b16 %v823, %v821
    %v832 = vpack.c.b16 %v824, %v822
    %v842 = vsel %vm213, %v780, 0
    %844 = vmatprep.subr.bf16.mxu0 0
    %845 = vmatpush1.bf16.msra.mxu0 0
    %846 = vmatprep.subr.bf16.mxu0 0
    %847 = vmatpush1.bf16.msra.mxu0 0
    %848 = vmatprep.subr.bf16.mxu0 0
    %849 = vmatpush1.bf16.msra.mxu0 0
    %850 = vmatprep.subr.bf16.mxu0 0
    %851 = vmatpush1.bf16.msra.mxu0 0
    %852 = vmatprep.subr.bf16.mxu0 %v832
    %853 = vmatpush1.bf16.msra.mxu0 %v831
    %854 = vmatprep.subr.bf16.mxu0 %v830
    %855 = vmatpush1.bf16.msra.mxu0 %v829
    %856 = vmatprep.subr.bf16.mxu0 %v828
    %857 = vmatpush1.bf16.msra.mxu0 %v827
    %858 = vmatprep.subr.bf16.mxu0 %v826
    %859 = vmatpush1.bf16.msra.mxu0 %v825
    %860 = vmatprep.subr.bf16.mxu0 0
    %861 = vmatpush2.bf16.msra.mxu0 0
    %862 = vmatprep.subr.bf16.mxu0 0
    %863 = vmatpush2.bf16.msra.mxu0 0
    %864 = vmatprep.subr.bf16.mxu0 0
    %865 = vmatpush2.bf16.msra.mxu0 0
    %866 = vmatprep.subr.bf16.mxu0 0
    %867 = vmatpush2.bf16.msra.mxu0 0
    %868 = vmatprep.subr.bf16.mxu0 0
    %869 = vmatpush2.bf16.msra.mxu0 0
    %870 = vmatprep.subr.bf16.mxu0 0
    %871 = vmatpush2.bf16.msra.mxu0 0
    %872 = vmatprep.subr.bf16.mxu0 0
    %873 = vmatpush2.bf16.msra.mxu0 0
    %874 = vmatprep.subr.bf16.mxu0 0
    %875 = vmatpush2.bf16.msra.mxu0 0
    %876 = vmatprep.mubr.bf16.mxu0 0
    %877 = vmatmul.mubr.bf16.gmra.mxu0 %v842
    %v878 = vpop.f32.mrf.mxu0
    %v879 = vadd.f32 %v794, %v878
    %v880 = vpop.f32.mrf.mxu0
    %v881 = vadd.f32 %v798, %v880
    %v882 = vpop.f32.mrf.mxu0
    %v883 = vadd.f32 %v794, %v882
    %v884 = vpop.f32.mrf.mxu0
    %v885 = vadd.f32 %v798, %v884
    %886 = vdwg.mxu0
    %v887 = vmax.f32 %v879, 0.0
    %v888 = vmax.f32 %v881, 0.0
    %v889 = vmax.f32 %v883, 0.0
    %v890 = vmax.f32 %v885, 0.0
    %v891 = vpack.c.bf16 %v889, %v887
    %v892 = vpack.c.bf16 %v890, %v888
    %v893 = vld [vmem:[%s27] sm:$0xf]
    %v894 = vld [vmem:[%s27 + $0x4] sm:$0xf]
    %v895 = vld [vmem:[%s27 + $0x8] sm:$0xf]
    %v896 = vld [vmem:[%s27 + $0xc] sm:$0xf]
    %v897 = vld [vmem:[%s27 + $0x10] sm:$0xf]
    %v898 = vld [vmem:[%s27 + $0x14] sm:$0xf]
    %v899 = vld [vmem:[%s27 + $0x18] sm:$0xf]
    %v900 = vld [vmem:[%s27 + $0x1c] sm:$0xf]
    %v901 = vld [vmem:[%s27 + $0x20] sm:$0xf]
    %v902 = vld [vmem:[%s27 + $0x24] sm:$0xf]
    %v903 = vld [vmem:[%s27 + $0x28] sm:$0xf]
    %v904 = vld [vmem:[%s27 + $0x2c] sm:$0xf]
    %v905 = vld [vmem:[%s27 + $0x30] sm:$0xf]
    %v906 = vld [vmem:[%s27 + $0x34] sm:$0xf]
    %v907 = vld [vmem:[%s27 + $0x38] sm:$0xf]
    %v908 = vld [vmem:[%s27 + $0x3c] sm:$0xf]
    %v909 = vld [vmem:[%s27 + $0x40] sm:$0xf]
    %v910 = vld [vmem:[%s27 + $0x44] sm:$0xf]
    %v911 = vld [vmem:[%s27 + $0x48] sm:$0xf]
    %v912 = vld [vmem:[%s27 + $0x4c] sm:$0xf]
    %v913 = vld [vmem:[%s27 + $0x50] sm:$0xf]
    %v914 = vld [vmem:[%s27 + $0x54] sm:$0xf]
    %v915 = vld [vmem:[%s27 + $0x58] sm:$0xf]
    %v916 = vld [vmem:[%s27 + $0x5c] sm:$0xf]
    %v917 = vld [vmem:[%s27 + $0x60] sm:$0xf]
    %v918 = vld [vmem:[%s27 + $0x64] sm:$0xf]
    %v919 = vld [vmem:[%s27 + $0x68] sm:$0xf]
    %v920 = vld [vmem:[%s27 + $0x6c] sm:$0xf]
    %v921 = vld [vmem:[%s27 + $0x70] sm:$0xf]
    %v922 = vld [vmem:[%s27 + $0x74] sm:$0xf]
    %v923 = vld [vmem:[%s27 + $0x78] sm:$0xf]
    %v924 = vld [vmem:[%s27 + $0x7c] sm:$0xf]
    %v925 = vld [vmem:[%s29] sm:$0x1]
    %v927 = vlaneseq
    %v928 = vshrl.u32 %v927, 7
    %v929 = vsub.s32 0, %v928
    %v930 = vrot.slane %v925, %v929
    %v964 = vunpack.c.l.b16 %v893
    %v965 = vunpack.c.l.b16 %v894
    %v966 = vunpack.c.l.b16 %v895
    %v967 = vunpack.c.l.b16 %v896
    %v968 = vunpack.c.l.b16 %v897
    %v969 = vunpack.c.l.b16 %v898
    %v970 = vunpack.c.l.b16 %v899
    %v971 = vunpack.c.l.b16 %v900
    %v972 = vunpack.c.l.b16 %v901
    %v973 = vunpack.c.l.b16 %v902
    %v974 = vunpack.c.l.b16 %v903
    %v975 = vunpack.c.l.b16 %v904
    %v976 = vunpack.c.l.b16 %v905
    %v977 = vunpack.c.l.b16 %v906
    %v978 = vunpack.c.l.b16 %v907
    %v979 = vunpack.c.l.b16 %v908
    %v980 = vunpack.c.l.b16 %v909
    %v981 = vunpack.c.l.b16 %v910
    %v982 = vunpack.c.l.b16 %v911
    %v983 = vunpack.c.l.b16 %v912
    %v984 = vunpack.c.l.b16 %v913
    %v985 = vunpack.c.l.b16 %v914
    %v986 = vunpack.c.l.b16 %v915
    %v987 = vunpack.c.l.b16 %v916
    %v988 = vunpack.c.l.b16 %v917
    %v989 = vunpack.c.l.b16 %v918
    %v990 = vunpack.c.l.b16 %v919
    %v991 = vunpack.c.l.b16 %v920
    %v992 = vunpack.c.l.b16 %v921
    %v993 = vunpack.c.l.b16 %v922
    %v994 = vunpack.c.l.b16 %v923
    %v995 = vunpack.c.l.b16 %v924
    %v996 = vpack.c.b16 %v965, %v964
    %v997 = vpack.c.b16 %v967, %v966
    %v998 = vpack.c.b16 %v969, %v968
    %v999 = vpack.c.b16 %v971, %v970
    %v1000 = vpack.c.b16 %v973, %v972
    %v1001 = vpack.c.b16 %v975, %v974
    %v1002 = vpack.c.b16 %v977, %v976
    %v1003 = vpack.c.b16 %v979, %v978
    %v1004 = vpack.c.b16 %v981, %v980
    %v1005 = vpack.c.b16 %v983, %v982
    %v1006 = vpack.c.b16 %v985, %v984
    %v1007 = vpack.c.b16 %v987, %v986
    %v1008 = vpack.c.b16 %v989, %v988
    %v1009 = vpack.c.b16 %v991, %v990
    %v1010 = vpack.c.b16 %v993, %v992
    %v1011 = vpack.c.b16 %v995, %v994
    %1028 = vmatprep.subr.bf16.mxu0 0
    %1029 = vmatpush1.bf16.msra.mxu0 %v1003
    %1030 = vmatprep.subr.bf16.mxu0 0
    %1031 = vmatpush1.bf16.msra.mxu0 %v1002
    %1032 = vmatprep.subr.bf16.mxu0 0
    %1033 = vmatpush1.bf16.msra.mxu0 %v1001
    %1034 = vmatprep.subr.bf16.mxu0 0
    %1035 = vmatpush1.bf16.msra.mxu0 %v1000
    %1036 = vmatprep.subr.bf16.mxu0 0
    %1037 = vmatpush1.bf16.msra.mxu0 %v999
    %1038 = vmatprep.subr.bf16.mxu0 0
    %1039 = vmatpush1.bf16.msra.mxu0 %v998
    %1040 = vmatprep.subr.bf16.mxu0 0
    %1041 = vmatpush1.bf16.msra.mxu0 %v997
    %1042 = vmatprep.subr.bf16.mxu0 0
    %1043 = vmatpush1.bf16.msra.mxu0 %v996
    %1044 = vmatprep.subr.bf16.mxu0 0
    %1045 = vmatpush2.bf16.msra.mxu0 %v1011
    %1046 = vmatprep.subr.bf16.mxu0 0
    %1047 = vmatpush2.bf16.msra.mxu0 %v1010
    %1048 = vmatprep.subr.bf16.mxu0 0
    %1049 = vmatpush2.bf16.msra.mxu0 %v1009
    %1050 = vmatprep.subr.bf16.mxu0 0
    %1051 = vmatpush2.bf16.msra.mxu0 %v1008
    %1052 = vmatprep.subr.bf16.mxu0 0
    %1053 = vmatpush2.bf16.msra.mxu0 %v1007
    %1054 = vmatprep.subr.bf16.mxu0 0
    %1055 = vmatpush2.bf16.msra.mxu0 %v1006
    %1056 = vmatprep.subr.bf16.mxu0 0
    %1057 = vmatpush2.bf16.msra.mxu0 %v1005
    %1058 = vmatprep.subr.bf16.mxu0 0
    %1059 = vmatpush2.bf16.msra.mxu0 %v1004
    %1060 = vmatprep.mubr.bf16.mxu0 %v892
    %1061 = vmatmul.mubr.bf16.gmra.mxu0 %v891
    %v1062 = vpop.f32.mrf.mxu0
    %v1063 = vadd.f32 %v930, %v1062
    %v1064 = vpop.f32.mrf.mxu0
    %v1065 = vpop.f32.mrf.mxu0
    %v1066 = vadd.f32 %v930, %v1065
    %v1067 = vpop.f32.mrf.mxu0
    %1068 = vdwg.mxu0
    %v1069 = vadd.f32 %v778, %v1063
    %v1070 = vadd.f32 %v779, %v1066
    %v1071 = vld [vmem:[%s31] sm:$0x1]
    %v1072 = vld [vmem:[%s33] sm:$0x1]
    %v1073 = vsel %vm213, %v1069, 0.0
    %1074 = vadd.xlane.f32.xlu0 %v1073
    %v1075 = vpop.xlane.xlu0 %1074
    %v1076 = vsel %vm213, %v1070, 0.0
    %1077 = vadd.xlane.f32.xlu0 %v1076
    %v1078 = vpop.xlane.xlu0 %1077
    %v1079 = vmul.f32 %v1075, %v743
    %v1080 = vmul.f32 %v1078, %v743
    %v1081 = vsub.f32 %v1069, %v1079
    %v1082 = vsub.f32 %v1070, %v1080
    %v1083 = vmul.f32 %v1081, %v1081
    %v1084 = vmul.f32 %v1082, %v1082
    %v1085 = vsel %vm213, %v1083, 0.0
    %1086 = vadd.xlane.f32.xlu0 %v1085
    %v1087 = vpop.xlane.xlu0 %1086
    %v1088 = vsel %vm213, %v1084, 0.0
    %1089 = vadd.xlane.f32.xlu0 %v1088
    %v1090 = vpop.xlane.xlu0 %1089
    %v1091 = vmul.f32 %v1087, %v743
    %v1092 = vmul.f32 %v1090, %v743
    %v1093 = vadd.f32 %v1091, 1e-05
    %v1094 = vadd.f32 %v1092, 1e-05
    %v1095 = vrsqrt.pop %v1093
    %v1096 = vrsqrt.pop %v1094
    %v1097 = vmul.f32 %v1081, %v1095
    %v1098 = vmul.f32 %v1082, %v1096
    %v1100 = vlaneseq
    %v1101 = vshrl.u32 %v1100, 7
    %v1102 = vsub.s32 0, %v1101
    %v1103 = vrot.slane %v1071, %v1102
    %v1105 = vmul.f32 %v1097, %v1103
    %v1106 = vmul.f32 %v1098, %v1103
    %v1108 = vlaneseq
    %v1109 = vshrl.u32 %v1108, 7
    %v1110 = vsub.s32 0, %v1109
    %v1111 = vrot.slane %v1072, %v1110
    %v1113 = vadd.f32 %v1105, %v1111
    %v1114 = vadd.f32 %v1106, %v1111
    %v1115 = vpack.c.bf16 %v1114, %v1113
    %v1116 = vld [vmem:[%s35] sm:$0xff]
    %v1117 = vld [vmem:[%s35 + $0x8] sm:$0xff]
    %v1118 = vld [vmem:[%s35 + $0x10] sm:$0xff]
    %v1119 = vld [vmem:[%s35 + $0x18] sm:$0xff]
    %v1120 = vld [vmem:[%s35 + $0x20] sm:$0xff]
    %v1121 = vld [vmem:[%s35 + $0x28] sm:$0xff]
    %v1122 = vld [vmem:[%s35 + $0x30] sm:$0xff]
    %v1123 = vld [vmem:[%s35 + $0x38] sm:$0xff]
    %v1124 = vld [vmem:[%s37] sm:$0x3]
    %v1126 = vlaneseq
    %v1127 = vshrl.u32 %v1126, 7
    %v1128 = vsub.s32 0, %v1127
    %v1129 = vrot.slane %v1124, %v1128
    %v1130 = vlaneseq
    %v1131 = vshrl.u32 %v1130, 7
    %v1132 = vsub.s32 1, %v1131
    %v1133 = vrot.slane %v1124, %v1132
    %v1144 = vunpack.c.l.b16 %v1116
    %v1145 = vunpack.c.h.b16 %v1116
    %v1146 = vunpack.c.l.b16 %v1117
    %v1147 = vunpack.c.h.b16 %v1117
    %v1148 = vunpack.c.l.b16 %v1118
    %v1149 = vunpack.c.h.b16 %v1118
    %v1150 = vunpack.c.l.b16 %v1119
    %v1151 = vunpack.c.h.b16 %v1119
    %v1152 = vunpack.c.l.b16 %v1120
    %v1153 = vunpack.c.h.b16 %v1120
    %v1154 = vunpack.c.l.b16 %v1121
    %v1155 = vunpack.c.h.b16 %v1121
    %v1156 = vunpack.c.l.b16 %v1122
    %v1157 = vunpack.c.h.b16 %v1122
    %v1158 = vunpack.c.l.b16 %v1123
    %v1159 = vunpack.c.h.b16 %v1123
    %v1160 = vpack.c.b16 %v1146, %v1144
    %v1161 = vpack.c.b16 %v1147, %v1145
    %v1162 = vpack.c.b16 %v1150, %v1148
    %v1163 = vpack.c.b16 %v1151, %v1149
    %v1164 = vpack.c.b16 %v1154, %v1152
    %v1165 = vpack.c.b16 %v1155, %v1153
    %v1166 = vpack.c.b16 %v1158, %v1156
    %v1167 = vpack.c.b16 %v1159, %v1157
    %v1177 = vsel %vm213, %v1115, 0
    %1179 = vmatprep.subr.bf16.mxu0 0
    %1180 = vmatpush1.bf16.msra.mxu0 0
    %1181 = vmatprep.subr.bf16.mxu0 0
    %1182 = vmatpush1.bf16.msra.mxu0 0
    %1183 = vmatprep.subr.bf16.mxu0 0
    %1184 = vmatpush1.bf16.msra.mxu0 0
    %1185 = vmatprep.subr.bf16.mxu0 0
    %1186 = vmatpush1.bf16.msra.mxu0 0
    %1187 = vmatprep.subr.bf16.mxu0 %v1167
    %1188 = vmatpush1.bf16.msra.mxu0 %v1166
    %1189 = vmatprep.subr.bf16.mxu0 %v1165
    %1190 = vmatpush1.bf16.msra.mxu0 %v1164
    %1191 = vmatprep.subr.bf16.mxu0 %v1163
    %1192 = vmatpush1.bf16.msra.mxu0 %v1162
    %1193 = vmatprep.subr.bf16.mxu0 %v1161
    %1194 = vmatpush1.bf16.msra.mxu0 %v1160
    %1195 = vmatprep.subr.bf16.mxu0 0
    %1196 = vmatpush2.bf16.msra.mxu0 0
    %1197 = vmatprep.subr.bf16.mxu0 0
    %1198 = vmatpush2.bf16.msra.mxu0 0
    %1199 = vmatprep.subr.bf16.mxu0 0
    %1200 = vmatpush2.bf16.msra.mxu0 0
    %1201 = vmatprep.subr.bf16.mxu0 0
    %1202 = vmatpush2.bf16.msra.mxu0 0
    %1203 = vmatprep.subr.bf16.mxu0 0
    %1204 = vmatpush2.bf16.msra.mxu0 0
    %1205 = vmatprep.subr.bf16.mxu0 0
    %1206 = vmatpush2.bf16.msra.mxu0 0
    %1207 = vmatprep.subr.bf16.mxu0 0
    %1208 = vmatpush2.bf16.msra.mxu0 0
    %1209 = vmatprep.subr.bf16.mxu0 0
    %1210 = vmatpush2.bf16.msra.mxu0 0
    %1211 = vmatprep.mubr.bf16.mxu0 0
    %1212 = vmatmul.mubr.bf16.gmra.mxu0 %v1177
    %v1213 = vpop.f32.mrf.mxu0
    %v1214 = vadd.f32 %v1129, %v1213
    %v1215 = vpop.f32.mrf.mxu0
    %v1216 = vadd.f32 %v1133, %v1215
    %v1217 = vpop.f32.mrf.mxu0
    %v1218 = vadd.f32 %v1129, %v1217
    %v1219 = vpop.f32.mrf.mxu0
    %v1220 = vadd.f32 %v1133, %v1219
    %1221 = vdwg.mxu0
    %v1222 = vmul.f32 %v1214, %v269
    %v1223 = vmul.f32 %v1214, %v271
    %v1224 = vmul.f32 %v1214, %v273
    %v1225 = vmul.f32 %v1214, %v275
    %v1226 = vmul.f32 %v1214, %v277
    %v1227 = vmul.f32 %v1214, %v279
    %v1228 = vmul.f32 %v1214, %v281
    %v1229 = vmul.f32 %v1214, %v283
    %v1230 = vmul.f32 %v1218, %v269
    %v1231 = vmul.f32 %v1218, %v271
    %v1232 = vmul.f32 %v1218, %v273
    %v1233 = vmul.f32 %v1218, %v275
    %v1234 = vmul.f32 %v1218, %v277
    %v1235 = vmul.f32 %v1218, %v279
    %v1236 = vmul.f32 %v1218, %v281
    %v1237 = vmul.f32 %v1218, %v283
    %v1238 = vmul.f32 %v1216, %v136
    %v1239 = vmul.f32 %v1216, %v137
    %v1240 = vmul.f32 %v1216, %v138
    %v1241 = vmul.f32 %v1216, %v139
    %v1242 = vmul.f32 %v1216, %v140
    %v1243 = vmul.f32 %v1216, %v141
    %v1244 = vmul.f32 %v1216, %v142
    %v1245 = vmul.f32 %v1216, %v143
    %v1246 = vmul.f32 %v1220, %v136
    %v1247 = vmul.f32 %v1220, %v137
    %v1248 = vmul.f32 %v1220, %v138
    %v1249 = vmul.f32 %v1220, %v139
    %v1250 = vmul.f32 %v1220, %v140
    %v1251 = vmul.f32 %v1220, %v141
    %v1252 = vmul.f32 %v1220, %v142
    %v1253 = vmul.f32 %v1220, %v143
    %v1254 = vpack.c.bf16 %v1214, %v1214
    %v1255 = vpack.c.bf16 %v1218, %v1218
    %v1256 = vpack.c.bf16 %v1223, %v1222
    %v1257 = vpack.c.bf16 %v1225, %v1224
    %v1258 = vpack.c.bf16 %v1227, %v1226
    %v1259 = vpack.c.bf16 %v1229, %v1228
    %v1260 = vpack.c.bf16 %v1231, %v1230
    %v1261 = vpack.c.bf16 %v1233, %v1232
    %v1262 = vpack.c.bf16 %v1235, %v1234
    %v1263 = vpack.c.bf16 %v1237, %v1236
    %1268 = vrot.lane.b32.xlu0 %v1256, 64
    %v1269 = vpop.permute.xlu0 %1268
    %1270 = vrot.lane.b32.xlu0 %v1257, 64
    %v1271 = vpop.permute.xlu0 %1270
    %1272 = vrot.lane.b32.xlu0 %v1258, 64
    %v1273 = vpop.permute.xlu0 %1272
    %1274 = vrot.lane.b32.xlu0 %v1259, 64
    %v1275 = vpop.permute.xlu0 %1274
    %v1277 = vsel %vm213, %v1254, 0
    %v1280 = vsel %vm213, %v1269, 0
    %v1283 = vsel %vm213, %v1271, 0
    %v1286 = vsel %vm213, %v1273, 0
    %v1289 = vsel %vm213, %v1275, 0
    %1291 = vmatprep.subr.bf16.mxu0 0
    %1292 = vmatpush1.bf16.xpose.msra.mxu0 0
    %1293 = vmatprep.subr.bf16.mxu0 0
    %1294 = vmatpush1.bf16.xpose.msra.mxu0 0
    %1295 = vmatprep.subr.bf16.mxu0 0
    %1296 = vmatpush1.bf16.xpose.msra.mxu0 0
    %1297 = vmatprep.subr.bf16.mxu0 0
    %1298 = vmatpush1.bf16.xpose.msra.mxu0 0
    %1299 = vmatprep.subr.bf16.mxu0 0
    %1300 = vmatpush1.bf16.xpose.msra.mxu0 %v1289
    %1301 = vmatprep.subr.bf16.mxu0 0
    %1302 = vmatpush1.bf16.xpose.msra.mxu0 %v1286
    %1303 = vmatprep.subr.bf16.mxu0 0
    %1304 = vmatpush1.bf16.xpose.msra.mxu0 %v1283
    %1305 = vmatprep.subr.bf16.mxu0 0
    %1306 = vmatpush1.bf16.xpose.msra.mxu0 %v1280
    %1307 = vmatprep.subr.bf16.mxu0 0
    %1308 = vmatpush2.bf16.xpose.msra.mxu0 0
    %1309 = vmatprep.subr.bf16.mxu0 0
    %1310 = vmatpush2.bf16.xpose.msra.mxu0 0
    %1311 = vmatprep.subr.bf16.mxu0 0
    %1312 = vmatpush2.bf16.xpose.msra.mxu0 0
    %1313 = vmatprep.subr.bf16.mxu0 0
    %1314 = vmatpush2.bf16.xpose.msra.mxu0 0
    %1315 = vmatprep.subr.bf16.mxu0 0
    %1316 = vmatpush2.bf16.xpose.msra.mxu0 0
    %1317 = vmatprep.subr.bf16.mxu0 0
    %1318 = vmatpush2.bf16.xpose.msra.mxu0 0
    %1319 = vmatprep.subr.bf16.mxu0 0
    %1320 = vmatpush2.bf16.xpose.msra.mxu0 0
    %1321 = vmatprep.subr.bf16.mxu0 0
    %1322 = vmatpush2.bf16.xpose.msra.mxu0 0
    %1323 = vmatprep.mubr.bf16.mxu0 0
    %1324 = vmatmul.mubr.bf16.gmra.mxu0 %v1277
    %v1325 = vpop.f32.mrf.mxu0
    %v1326 = vadd.f32 %v134, %v1325
    %v1327 = vpop.f32.mrf.mxu0
    %v1328 = vpop.f32.mrf.mxu0
    %v1329 = vpop.f32.mrf.mxu0
    %1330 = vdwg.mxu0
    %1335 = vrot.lane.b32.xlu0 %v1260, 64
    %v1336 = vpop.permute.xlu0 %1335
    %1337 = vrot.lane.b32.xlu0 %v1261, 64
    %v1338 = vpop.permute.xlu0 %1337
    %1339 = vrot.lane.b32.xlu0 %v1262, 64
    %v1340 = vpop.permute.xlu0 %1339
    %1341 = vrot.lane.b32.xlu0 %v1263, 64
    %v1342 = vpop.permute.xlu0 %1341
    %v1344 = vsel %vm213, %v1255, 0
    %v1347 = vsel %vm213, %v1336, 0
    %v1350 = vsel %vm213, %v1338, 0
    %v1353 = vsel %vm213, %v1340, 0
    %v1356 = vsel %vm213, %v1342, 0
    %1358 = vmatprep.subr.bf16.mxu0 0
    %1359 = vmatpush1.bf16.xpose.msra.mxu0 0
    %1360 = vmatprep.subr.bf16.mxu0 0
    %1361 = vmatpush1.bf16.xpose.msra.mxu0 0
    %1362 = vmatprep.subr.bf16.mxu0 0
    %1363 = vmatpush1.bf16.xpose.msra.mxu0 0
    %1364 = vmatprep.subr.bf16.mxu0 0
    %1365 = vmatpush1.bf16.xpose.msra.mxu0 0
    %1366 = vmatprep.subr.bf16.mxu0 0
    %1367 = vmatpush1.bf16.xpose.msra.mxu0 %v1356
    %1368 = vmatprep.subr.bf16.mxu0 0
    %1369 = vmatpush1.bf16.xpose.msra.mxu0 %v1353
    %1370 = vmatprep.subr.bf16.mxu0 0
    %1371 = vmatpush1.bf16.xpose.msra.mxu0 %v1350
    %1372 = vmatprep.subr.bf16.mxu0 0
    %1373 = vmatpush1.bf16.xpose.msra.mxu0 %v1347
    %1374 = vmatprep.subr.bf16.mxu0 0
    %1375 = vmatpush2.bf16.xpose.msra.mxu0 0
    %1376 = vmatprep.subr.bf16.mxu0 0
    %1377 = vmatpush2.bf16.xpose.msra.mxu0 0
    %1378 = vmatprep.subr.bf16.mxu0 0
    %1379 = vmatpush2.bf16.xpose.msra.mxu0 0
    %1380 = vmatprep.subr.bf16.mxu0 0
    %1381 = vmatpush2.bf16.xpose.msra.mxu0 0
    %1382 = vmatprep.subr.bf16.mxu0 0
    %1383 = vmatpush2.bf16.xpose.msra.mxu0 0
    %1384 = vmatprep.subr.bf16.mxu0 0
    %1385 = vmatpush2.bf16.xpose.msra.mxu0 0
    %1386 = vmatprep.subr.bf16.mxu0 0
    %1387 = vmatpush2.bf16.xpose.msra.mxu0 0
    %1388 = vmatprep.subr.bf16.mxu0 0
    %1389 = vmatpush2.bf16.xpose.msra.mxu0 0
    %1390 = vmatprep.mubr.bf16.mxu0 0
    %1391 = vmatmul.mubr.bf16.gmra.mxu0 %v1344
    %v1392 = vpop.f32.mrf.mxu0
    %v1393 = vadd.f32 %v135, %v1392
    %v1394 = vpop.f32.mrf.mxu0
    %v1395 = vpop.f32.mrf.mxu0
    %v1396 = vpop.f32.mrf.mxu0
    %1397 = vdwg.mxu0
    %v1398 = vsel %vm213, %v1326, -inf
    %1399 = vmax.xlane.f32.xlu0 %v1398
    %v1400 = vpop.xlane.xlu0 %1399
    %v1401 = vsel %vm213, %v1393, -inf
    %1402 = vmax.xlane.f32.xlu0 %v1401
    %v1403 = vpop.xlane.xlu0 %1402
    %v1404 = vsub.f32 %v1326, %v1400
    %v1405 = vsub.f32 %v1393, %v1403
    %v1406 = vmul.f32 %v1404, 1.442695
    %v1407 = vpow.pop %v1406
    %v1408 = vmul.f32 %v1405, 1.442695
    %v1409 = vpow.pop %v1408
    %v1410 = vpack.c.bf16 %v1409, %v1407
    %v1412 = vsel %vm213, %v1410, 0
    %1414 = vmatprep.subr.bf16.mxu0 0
    %1415 = vmatpush1.bf16.msra.mxu0 0
    %1416 = vmatprep.subr.bf16.mxu0 0
    %1417 = vmatpush1.bf16.msra.mxu0 0
    %1418 = vmatprep.subr.bf16.mxu0 0
    %1419 = vmatpush1.bf16.msra.mxu0 0
    %1420 = vmatprep.subr.bf16.mxu0 0
    %1421 = vmatpush1.bf16.msra.mxu0 0
    %1422 = vmatprep.subr.bf16.mxu0 0
    %1423 = vmatpush1.bf16.msra.mxu0 %v500
    %1424 = vmatprep.subr.bf16.mxu0 0
    %1425 = vmatpush1.bf16.msra.mxu0 %v499
    %1426 = vmatprep.subr.bf16.mxu0 0
    %1427 = vmatpush1.bf16.msra.mxu0 %v498
    %1428 = vmatprep.subr.bf16.mxu0 0
    %1429 = vmatpush1.bf16.msra.mxu0 %v497
    %1430 = vmatprep.subr.bf16.mxu0 0
    %1431 = vmatpush2.bf16.msra.mxu0 0
    %1432 = vmatprep.subr.bf16.mxu0 0
    %1433 = vmatpush2.bf16.msra.mxu0 0
    %1434 = vmatprep.subr.bf16.mxu0 0
    %1435 = vmatpush2.bf16.msra.mxu0 0
    %1436 = vmatprep.subr.bf16.mxu0 0
    %1437 = vmatpush2.bf16.msra.mxu0 0
    %1438 = vmatprep.subr.bf16.mxu0 0
    %1439 = vmatpush2.bf16.msra.mxu0 0
    %1440 = vmatprep.subr.bf16.mxu0 0
    %1441 = vmatpush2.bf16.msra.mxu0 0
    %1442 = vmatprep.subr.bf16.mxu0 0
    %1443 = vmatpush2.bf16.msra.mxu0 0
    %1444 = vmatprep.subr.bf16.mxu0 0
    %1445 = vmatpush2.bf16.msra.mxu0 0
    %1446 = vmatprep.mubr.bf16.mxu0 0
    %1447 = vmatmul.mubr.bf16.gmra.mxu0 %v1412
    %v1448 = vpop.f32.mrf.mxu0
    %v1449 = vadd.f32 0.0, %v1448
    %v1450 = vpop.f32.mrf.mxu0
    %v1451 = vpop.f32.mrf.mxu0
    %v1452 = vadd.f32 0.0, %v1451
    %v1453 = vpop.f32.mrf.mxu0
    %1454 = vdwg.mxu0
    %v1455 = vrcp.pop %v1449
    %v1456 = vrcp.pop %v1452
    %v1457 = vmul.f32 %v1407, %v1455
    %v1458 = vmul.f32 %v1409, %v1456
    %v1459 = vpack.c.bf16 %v1457, %v1457
    %v1460 = vpack.c.bf16 %v1458, %v1458
    %v1461 = vpack.c.bf16 %v1239, %v1238
    %v1462 = vpack.c.bf16 %v1241, %v1240
    %v1463 = vpack.c.bf16 %v1243, %v1242
    %v1464 = vpack.c.bf16 %v1245, %v1244
    %v1465 = vpack.c.bf16 %v1247, %v1246
    %v1466 = vpack.c.bf16 %v1249, %v1248
    %v1467 = vpack.c.bf16 %v1251, %v1250
    %v1468 = vpack.c.bf16 %v1253, %v1252
    %v1470 = vsel %vm213, %v1459, 0
    %1472 = vmatprep.subr.bf16.mxu0 0
    %1473 = vmatpush1.bf16.msra.mxu0 0
    %1474 = vmatprep.subr.bf16.mxu0 0
    %1475 = vmatpush1.bf16.msra.mxu0 0
    %1476 = vmatprep.subr.bf16.mxu0 0
    %1477 = vmatpush1.bf16.msra.mxu0 0
    %1478 = vmatprep.subr.bf16.mxu0 0
    %1479 = vmatpush1.bf16.msra.mxu0 0
    %1480 = vmatprep.subr.bf16.mxu0 0
    %1481 = vmatpush1.bf16.msra.mxu0 %v1464
    %1482 = vmatprep.subr.bf16.mxu0 0
    %1483 = vmatpush1.bf16.msra.mxu0 %v1463
    %1484 = vmatprep.subr.bf16.mxu0 0
    %1485 = vmatpush1.bf16.msra.mxu0 %v1462
    %1486 = vmatprep.subr.bf16.mxu0 0
    %1487 = vmatpush1.bf16.msra.mxu0 %v1461
    %1488 = vmatprep.subr.bf16.mxu0 0
    %1489 = vmatpush2.bf16.msra.mxu0 0
    %1490 = vmatprep.subr.bf16.mxu0 0
    %1491 = vmatpush2.bf16.msra.mxu0 0
    %1492 = vmatprep.subr.bf16.mxu0 0
    %1493 = vmatpush2.bf16.msra.mxu0 0
    %1494 = vmatprep.subr.bf16.mxu0 0
    %1495 = vmatpush2.bf16.msra.mxu0 0
    %1496 = vmatprep.subr.bf16.mxu0 0
    %1497 = vmatpush2.bf16.msra.mxu0 0
    %1498 = vmatprep.subr.bf16.mxu0 0
    %1499 = vmatpush2.bf16.msra.mxu0 0
    %1500 = vmatprep.subr.bf16.mxu0 0
    %1501 = vmatpush2.bf16.msra.mxu0 0
    %1502 = vmatprep.subr.bf16.mxu0 0
    %1503 = vmatpush2.bf16.msra.mxu0 0
    %1504 = vmatprep.mubr.bf16.mxu0 0
    %1505 = vmatmul.mubr.bf16.gmra.mxu0 %v1470
    %v1506 = vpop.f32.mrf.mxu0
    %v1507 = vadd.f32 0.0, %v1506
    %v1508 = vpop.f32.mrf.mxu0
    %v1509 = vpop.f32.mrf.mxu0
    %v1510 = vpop.f32.mrf.mxu0
    %1511 = vdwg.mxu0
    %v1513 = vsel %vm213, %v1460, 0
    %1515 = vmatprep.subr.bf16.mxu0 0
    %1516 = vmatpush1.bf16.msra.mxu0 0
    %1517 = vmatprep.subr.bf16.mxu0 0
    %1518 = vmatpush1.bf16.msra.mxu0 0
    %1519 = vmatprep.subr.bf16.mxu0 0
    %1520 = vmatpush1.bf16.msra.mxu0 0
    %1521 = vmatprep.subr.bf16.mxu0 0
    %1522 = vmatpush1.bf16.msra.mxu0 0
    %1523 = vmatprep.subr.bf16.mxu0 0
    %1524 = vmatpush1.bf16.msra.mxu0 %v1468
    %1525 = vmatprep.subr.bf16.mxu0 0
    %1526 = vmatpush1.bf16.msra.mxu0 %v1467
    %1527 = vmatprep.subr.bf16.mxu0 0
    %1528 = vmatpush1.bf16.msra.mxu0 %v1466
    %1529 = vmatprep.subr.bf16.mxu0 0
    %1530 = vmatpush1.bf16.msra.mxu0 %v1465
    %1531 = vmatprep.subr.bf16.mxu0 0
    %1532 = vmatpush2.bf16.msra.mxu0 0
    %1533 = vmatprep.subr.bf16.mxu0 0
    %1534 = vmatpush2.bf16.msra.mxu0 0
    %1535 = vmatprep.subr.bf16.mxu0 0
    %1536 = vmatpush2.bf16.msra.mxu0 0
    %1537 = vmatprep.subr.bf16.mxu0 0
    %1538 = vmatpush2.bf16.msra.mxu0 0
    %1539 = vmatprep.subr.bf16.mxu0 0
    %1540 = vmatpush2.bf16.msra.mxu0 0
    %1541 = vmatprep.subr.bf16.mxu0 0
    %1542 = vmatpush2.bf16.msra.mxu0 0
    %1543 = vmatprep.subr.bf16.mxu0 0
    %1544 = vmatpush2.bf16.msra.mxu0 0
    %1545 = vmatprep.subr.bf16.mxu0 0
    %1546 = vmatpush2.bf16.msra.mxu0 0
    %1547 = vmatprep.mubr.bf16.mxu0 0
    %1548 = vmatmul.mubr.bf16.gmra.mxu0 %v1513
    %v1549 = vpop.f32.mrf.mxu0
    %v1550 = vadd.f32 0.0, %v1549
    %v1551 = vpop.f32.mrf.mxu0
    %v1552 = vpop.f32.mrf.mxu0
    %v1553 = vpop.f32.mrf.mxu0
    %1554 = vdwg.mxu0
    %v1555 = vpack.c.bf16 %v1550, %v1507
    %v1556 = vld [vmem:[%s39] sm:$0xf]
    %v1557 = vld [vmem:[%s39 + $0x4] sm:$0xf]
    %v1558 = vld [vmem:[%s39 + $0x8] sm:$0xf]
    %v1559 = vld [vmem:[%s39 + $0xc] sm:$0xf]
    %v1560 = vld [vmem:[%s39 + $0x10] sm:$0xf]
    %v1561 = vld [vmem:[%s39 + $0x14] sm:$0xf]
    %v1562 = vld [vmem:[%s39 + $0x18] sm:$0xf]
    %v1563 = vld [vmem:[%s39 + $0x1c] sm:$0xf]
    %v1564 = vld [vmem:[%s41] sm:$0x1]
    %v1566 = vlaneseq
    %v1567 = vshrl.u32 %v1566, 7
    %v1568 = vsub.s32 0, %v1567
    %v1569 = vrot.slane %v1564, %v1568
    %v1579 = vunpack.c.l.b16 %v1556
    %v1580 = vunpack.c.l.b16 %v1557
    %v1581 = vunpack.c.l.b16 %v1558
    %v1582 = vunpack.c.l.b16 %v1559
    %v1583 = vunpack.c.l.b16 %v1560
    %v1584 = vunpack.c.l.b16 %v1561
    %v1585 = vunpack.c.l.b16 %v1562
    %v1586 = vunpack.c.l.b16 %v1563
    %v1587 = vpack.c.b16 %v1580, %v1579
    %v1588 = vpack.c.b16 %v1582, %v1581
    %v1589 = vpack.c.b16 %v1584, %v1583
    %v1590 = vpack.c.b16 %v1586, %v1585
    %v1596 = vsel %vm213, %v1555, 0
    %1598 = vmatprep.subr.bf16.mxu0 0
    %1599 = vmatpush1.bf16.msra.mxu0 0
    %1600 = vmatprep.subr.bf16.mxu0 0
    %1601 = vmatpush1.bf16.msra.mxu0 0
    %1602 = vmatprep.subr.bf16.mxu0 0
    %1603 = vmatpush1.bf16.msra.mxu0 0
    %1604 = vmatprep.subr.bf16.mxu0 0
    %1605 = vmatpush1.bf16.msra.mxu0 0
    %1606 = vmatprep.subr.bf16.mxu0 0
    %1607 = vmatpush1.bf16.msra.mxu0 %v1590
    %1608 = vmatprep.subr.bf16.mxu0 0
    %1609 = vmatpush1.bf16.msra.mxu0 %v1589
    %1610 = vmatprep.subr.bf16.mxu0 0
    %1611 = vmatpush1.bf16.msra.mxu0 %v1588
    %1612 = vmatprep.subr.bf16.mxu0 0
    %1613 = vmatpush1.bf16.msra.mxu0 %v1587
    %1614 = vmatprep.subr.bf16.mxu0 0
    %1615 = vmatpush2.bf16.msra.mxu0 0
    %1616 = vmatprep.subr.bf16.mxu0 0
    %1617 = vmatpush2.bf16.msra.mxu0 0
    %1618 = vmatprep.subr.bf16.mxu0 0
    %1619 = vmatpush2.bf16.msra.mxu0 0
    %1620 = vmatprep.subr.bf16.mxu0 0
    %1621 = vmatpush2.bf16.msra.mxu0 0
    %1622 = vmatprep.subr.bf16.mxu0 0
    %1623 = vmatpush2.bf16.msra.mxu0 0
    %1624 = vmatprep.subr.bf16.mxu0 0
    %1625 = vmatpush2.bf16.msra.mxu0 0
    %1626 = vmatprep.subr.bf16.mxu0 0
    %1627 = vmatpush2.bf16.msra.mxu0 0
    %1628 = vmatprep.subr.bf16.mxu0 0
    %1629 = vmatpush2.bf16.msra.mxu0 0
    %1630 = vmatprep.mubr.bf16.mxu0 0
    %1631 = vmatmul.mubr.bf16.gmra.mxu0 %v1596
    %v1632 = vpop.f32.mrf.mxu0
    %v1633 = vadd.f32 %v1569, %v1632
    %v1634 = vpop.f32.mrf.mxu0
    %v1635 = vpop.f32.mrf.mxu0
    %v1636 = vadd.f32 %v1569, %v1635
    %v1637 = vpop.f32.mrf.mxu0
    %1638 = vdwg.mxu0
    %v1639 = vadd.f32 %v1113, %v1633
    %v1640 = vadd.f32 %v1114, %v1636
    %v1641 = vld [vmem:[%s43] sm:$0x1]
    %v1642 = vld [vmem:[%s45] sm:$0x1]
    %v1643 = vsel %vm213, %v1639, 0.0
    %1644 = vadd.xlane.f32.xlu0 %v1643
    %v1645 = vpop.xlane.xlu0 %1644
    %v1646 = vsel %vm213, %v1640, 0.0
    %1647 = vadd.xlane.f32.xlu0 %v1646
    %v1648 = vpop.xlane.xlu0 %1647
    %v1649 = vmul.f32 %v1645, %v743
    %v1650 = vmul.f32 %v1648, %v743
    %v1651 = vsub.f32 %v1639, %v1649
    %v1652 = vsub.f32 %v1640, %v1650
    %v1653 = vmul.f32 %v1651, %v1651
    %v1654 = vmul.f32 %v1652, %v1652
    %v1655 = vsel %vm213, %v1653, 0.0
    %1656 = vadd.xlane.f32.xlu0 %v1655
    %v1657 = vpop.xlane.xlu0 %1656
    %v1658 = vsel %vm213, %v1654, 0.0
    %1659 = vadd.xlane.f32.xlu0 %v1658
    %v1660 = vpop.xlane.xlu0 %1659
    %v1661 = vmul.f32 %v1657, %v743
    %v1662 = vmul.f32 %v1660, %v743
    %v1663 = vadd.f32 %v1661, 1e-05
    %v1664 = vadd.f32 %v1662, 1e-05
    %v1665 = vrsqrt.pop %v1663
    %v1666 = vrsqrt.pop %v1664
    %v1667 = vmul.f32 %v1651, %v1665
    %v1668 = vmul.f32 %v1652, %v1666
    %v1670 = vlaneseq
    %v1671 = vshrl.u32 %v1670, 7
    %v1672 = vsub.s32 0, %v1671
    %v1673 = vrot.slane %v1641, %v1672
    %v1675 = vmul.f32 %v1667, %v1673
    %v1676 = vmul.f32 %v1668, %v1673
    %v1678 = vlaneseq
    %v1679 = vshrl.u32 %v1678, 7
    %v1680 = vsub.s32 0, %v1679
    %v1681 = vrot.slane %v1642, %v1680
    %v1683 = vadd.f32 %v1675, %v1681
    %v1684 = vadd.f32 %v1676, %v1681
    %v1685 = vpack.c.bf16 %v1684, %v1683
    %v1686 = vld [vmem:[%s47] sm:$0xff]
    %v1687 = vld [vmem:[%s47 + $0x8] sm:$0xff]
    %v1688 = vld [vmem:[%s47 + $0x10] sm:$0xff]
    %v1689 = vld [vmem:[%s47 + $0x18] sm:$0xff]
    %v1690 = vld [vmem:[%s47 + $0x20] sm:$0xff]
    %v1691 = vld [vmem:[%s47 + $0x28] sm:$0xff]
    %v1692 = vld [vmem:[%s47 + $0x30] sm:$0xff]
    %v1693 = vld [vmem:[%s47 + $0x38] sm:$0xff]
    %v1694 = vld [vmem:[%s49] sm:$0x3]
    %v1696 = vlaneseq
    %v1697 = vshrl.u32 %v1696, 7
    %v1698 = vsub.s32 0, %v1697
    %v1699 = vrot.slane %v1694, %v1698
    %v1700 = vlaneseq
    %v1701 = vshrl.u32 %v1700, 7
    %v1702 = vsub.s32 1, %v1701
    %v1703 = vrot.slane %v1694, %v1702
    %v1714 = vunpack.c.l.b16 %v1686
    %v1715 = vunpack.c.h.b16 %v1686
    %v1716 = vunpack.c.l.b16 %v1687
    %v1717 = vunpack.c.h.b16 %v1687
    %v1718 = vunpack.c.l.b16 %v1688
    %v1719 = vunpack.c.h.b16 %v1688
    %v1720 = vunpack.c.l.b16 %v1689
    %v1721 = vunpack.c.h.b16 %v1689
    %v1722 = vunpack.c.l.b16 %v1690
    %v1723 = vunpack.c.h.b16 %v1690
    %v1724 = vunpack.c.l.b16 %v1691
    %v1725 = vunpack.c.h.b16 %v1691
    %v1726 = vunpack.c.l.b16 %v1692
    %v1727 = vunpack.c.h.b16 %v1692
    %v1728 = vunpack.c.l.b16 %v1693
    %v1729 = vunpack.c.h.b16 %v1693
    %v1730 = vpack.c.b16 %v1716, %v1714
    %v1731 = vpack.c.b16 %v1717, %v1715
    %v1732 = vpack.c.b16 %v1720, %v1718
    %v1733 = vpack.c.b16 %v1721, %v1719
    %v1734 = vpack.c.b16 %v1724, %v1722
    %v1735 = vpack.c.b16 %v1725, %v1723
    %v1736 = vpack.c.b16 %v1728, %v1726
    %v1737 = vpack.c.b16 %v1729, %v1727
    %v1747 = vsel %vm213, %v1685, 0
    %1749 = vmatprep.subr.bf16.mxu0 0
    %1750 = vmatpush1.bf16.msra.mxu0 0
    %1751 = vmatprep.subr.bf16.mxu0 0
    %1752 = vmatpush1.bf16.msra.mxu0 0
    %1753 = vmatprep.subr.bf16.mxu0 0
    %1754 = vmatpush1.bf16.msra.mxu0 0
    %1755 = vmatprep.subr.bf16.mxu0 0
    %1756 = vmatpush1.bf16.msra.mxu0 0
    %1757 = vmatprep.subr.bf16.mxu0 %v1737
    %1758 = vmatpush1.bf16.msra.mxu0 %v1736
    %1759 = vmatprep.subr.bf16.mxu0 %v1735
    %1760 = vmatpush1.bf16.msra.mxu0 %v1734
    %1761 = vmatprep.subr.bf16.mxu0 %v1733
    %1762 = vmatpush1.bf16.msra.mxu0 %v1732
    %1763 = vmatprep.subr.bf16.mxu0 %v1731
    %1764 = vmatpush1.bf16.msra.mxu0 %v1730
    %1765 = vmatprep.subr.bf16.mxu0 0
    %1766 = vmatpush2.bf16.msra.mxu0 0
    %1767 = vmatprep.subr.bf16.mxu0 0
    %1768 = vmatpush2.bf16.msra.mxu0 0
    %1769 = vmatprep.subr.bf16.mxu0 0
    %1770 = vmatpush2.bf16.msra.mxu0 0
    %1771 = vmatprep.subr.bf16.mxu0 0
    %1772 = vmatpush2.bf16.msra.mxu0 0
    %1773 = vmatprep.subr.bf16.mxu0 0
    %1774 = vmatpush2.bf16.msra.mxu0 0
    %1775 = vmatprep.subr.bf16.mxu0 0
    %1776 = vmatpush2.bf16.msra.mxu0 0
    %1777 = vmatprep.subr.bf16.mxu0 0
    %1778 = vmatpush2.bf16.msra.mxu0 0
    %1779 = vmatprep.subr.bf16.mxu0 0
    %1780 = vmatpush2.bf16.msra.mxu0 0
    %1781 = vmatprep.mubr.bf16.mxu0 0
    %1782 = vmatmul.mubr.bf16.gmra.mxu0 %v1747
    %v1783 = vpop.f32.mrf.mxu0
    %v1784 = vadd.f32 %v1699, %v1783
    %v1785 = vpop.f32.mrf.mxu0
    %v1786 = vadd.f32 %v1703, %v1785
    %v1787 = vpop.f32.mrf.mxu0
    %v1788 = vadd.f32 %v1699, %v1787
    %v1789 = vpop.f32.mrf.mxu0
    %v1790 = vadd.f32 %v1703, %v1789
    %1791 = vdwg.mxu0
    %v1792 = vmax.f32 %v1784, 0.0
    %v1793 = vmax.f32 %v1786, 0.0
    %v1794 = vmax.f32 %v1788, 0.0
    %v1795 = vmax.f32 %v1790, 0.0
    %v1796 = vpack.c.bf16 %v1794, %v1792
    %v1797 = vpack.c.bf16 %v1795, %v1793
    %v1798 = vld [vmem:[%s51] sm:$0xf]
    %v1799 = vld [vmem:[%s51 + $0x4] sm:$0xf]
    %v1800 = vld [vmem:[%s51 + $0x8] sm:$0xf]
    %v1801 = vld [vmem:[%s51 + $0xc] sm:$0xf]
    %v1802 = vld [vmem:[%s51 + $0x10] sm:$0xf]
    %v1803 = vld [vmem:[%s51 + $0x14] sm:$0xf]
    %v1804 = vld [vmem:[%s51 + $0x18] sm:$0xf]
    %v1805 = vld [vmem:[%s51 + $0x1c] sm:$0xf]
    %v1806 = vld [vmem:[%s51 + $0x20] sm:$0xf]
    %v1807 = vld [vmem:[%s51 + $0x24] sm:$0xf]
    %v1808 = vld [vmem:[%s51 + $0x28] sm:$0xf]
    %v1809 = vld [vmem:[%s51 + $0x2c] sm:$0xf]
    %v1810 = vld [vmem:[%s51 + $0x30] sm:$0xf]
    %v1811 = vld [vmem:[%s51 + $0x34] sm:$0xf]
    %v1812 = vld [vmem:[%s51 + $0x38] sm:$0xf]
    %v1813 = vld [vmem:[%s51 + $0x3c] sm:$0xf]
    %v1814 = vld [vmem:[%s51 + $0x40] sm:$0xf]
    %v1815 = vld [vmem:[%s51 + $0x44] sm:$0xf]
    %v1816 = vld [vmem:[%s51 + $0x48] sm:$0xf]
    %v1817 = vld [vmem:[%s51 + $0x4c] sm:$0xf]
    %v1818 = vld [vmem:[%s51 + $0x50] sm:$0xf]
    %v1819 = vld [vmem:[%s51 + $0x54] sm:$0xf]
    %v1820 = vld [vmem:[%s51 + $0x58] sm:$0xf]
    %v1821 = vld [vmem:[%s51 + $0x5c] sm:$0xf]
    %v1822 = vld [vmem:[%s51 + $0x60] sm:$0xf]
    %v1823 = vld [vmem:[%s51 + $0x64] sm:$0xf]
    %v1824 = vld [vmem:[%s51 + $0x68] sm:$0xf]
    %v1825 = vld [vmem:[%s51 + $0x6c] sm:$0xf]
    %v1826 = vld [vmem:[%s51 + $0x70] sm:$0xf]
    %v1827 = vld [vmem:[%s51 + $0x74] sm:$0xf]
    %v1828 = vld [vmem:[%s51 + $0x78] sm:$0xf]
    %v1829 = vld [vmem:[%s51 + $0x7c] sm:$0xf]
    %v1830 = vld [vmem:[%s53] sm:$0x1]
    %v1832 = vlaneseq
    %v1833 = vshrl.u32 %v1832, 7
    %v1834 = vsub.s32 0, %v1833
    %v1835 = vrot.slane %v1830, %v1834
    %v1869 = vunpack.c.l.b16 %v1798
    %v1870 = vunpack.c.l.b16 %v1799
    %v1871 = vunpack.c.l.b16 %v1800
    %v1872 = vunpack.c.l.b16 %v1801
    %v1873 = vunpack.c.l.b16 %v1802
    %v1874 = vunpack.c.l.b16 %v1803
    %v1875 = vunpack.c.l.b16 %v1804
    %v1876 = vunpack.c.l.b16 %v1805
    %v1877 = vunpack.c.l.b16 %v1806
    %v1878 = vunpack.c.l.b16 %v1807
    %v1879 = vunpack.c.l.b16 %v1808
    %v1880 = vunpack.c.l.b16 %v1809
    %v1881 = vunpack.c.l.b16 %v1810
    %v1882 = vunpack.c.l.b16 %v1811
    %v1883 = vunpack.c.l.b16 %v1812
    %v1884 = vunpack.c.l.b16 %v1813
    %v1885 = vunpack.c.l.b16 %v1814
    %v1886 = vunpack.c.l.b16 %v1815
    %v1887 = vunpack.c.l.b16 %v1816
    %v1888 = vunpack.c.l.b16 %v1817
    %v1889 = vunpack.c.l.b16 %v1818
    %v1890 = vunpack.c.l.b16 %v1819
    %v1891 = vunpack.c.l.b16 %v1820
    %v1892 = vunpack.c.l.b16 %v1821
    %v1893 = vunpack.c.l.b16 %v1822
    %v1894 = vunpack.c.l.b16 %v1823
    %v1895 = vunpack.c.l.b16 %v1824
    %v1896 = vunpack.c.l.b16 %v1825
    %v1897 = vunpack.c.l.b16 %v1826
    %v1898 = vunpack.c.l.b16 %v1827
    %v1899 = vunpack.c.l.b16 %v1828
    %v1900 = vunpack.c.l.b16 %v1829
    %v1901 = vpack.c.b16 %v1870, %v1869
    %v1902 = vpack.c.b16 %v1872, %v1871
    %v1903 = vpack.c.b16 %v1874, %v1873
    %v1904 = vpack.c.b16 %v1876, %v1875
    %v1905 = vpack.c.b16 %v1878, %v1877
    %v1906 = vpack.c.b16 %v1880, %v1879
    %v1907 = vpack.c.b16 %v1882, %v1881
    %v1908 = vpack.c.b16 %v1884, %v1883
    %v1909 = vpack.c.b16 %v1886, %v1885
    %v1910 = vpack.c.b16 %v1888, %v1887
    %v1911 = vpack.c.b16 %v1890, %v1889
    %v1912 = vpack.c.b16 %v1892, %v1891
    %v1913 = vpack.c.b16 %v1894, %v1893
    %v1914 = vpack.c.b16 %v1896, %v1895
    %v1915 = vpack.c.b16 %v1898, %v1897
    %v1916 = vpack.c.b16 %v1900, %v1899
    %1933 = vmatprep.subr.bf16.mxu0 0
    %1934 = vmatpush1.bf16.msra.mxu0 %v1908
    %1935 = vmatprep.subr.bf16.mxu0 0
    %1936 = vmatpush1.bf16.msra.mxu0 %v1907
    %1937 = vmatprep.subr.bf16.mxu0 0
    %1938 = vmatpush1.bf16.msra.mxu0 %v1906
    %1939 = vmatprep.subr.bf16.mxu0 0
    %1940 = vmatpush1.bf16.msra.mxu0 %v1905
    %1941 = vmatprep.subr.bf16.mxu0 0
    %1942 = vmatpush1.bf16.msra.mxu0 %v1904
    %1943 = vmatprep.subr.bf16.mxu0 0
    %1944 = vmatpush1.bf16.msra.mxu0 %v1903
    %1945 = vmatprep.subr.bf16.mxu0 0
    %1946 = vmatpush1.bf16.msra.mxu0 %v1902
    %1947 = vmatprep.subr.bf16.mxu0 0
    %1948 = vmatpush1.bf16.msra.mxu0 %v1901
    %1949 = vmatprep.subr.bf16.mxu0 0
    %1950 = vmatpush2.bf16.msra.mxu0 %v1916
    %1951 = vmatprep.subr.bf16.mxu0 0
    %1952 = vmatpush2.bf16.msra.mxu0 %v1915
    %1953 = vmatprep.subr.bf16.mxu0 0
    %1954 = vmatpush2.bf16.msra.mxu0 %v1914
    %1955 = vmatprep.subr.bf16.mxu0 0
    %1956 = vmatpush2.bf16.msra.mxu0 %v1913
    %1957 = vmatprep.subr.bf16.mxu0 0
    %1958 = vmatpush2.bf16.msra.mxu0 %v1912
    %1959 = vmatprep.subr.bf16.mxu0 0
    %1960 = vmatpush2.bf16.msra.mxu0 %v1911
    %1961 = vmatprep.subr.bf16.mxu0 0
    %1962 = vmatpush2.bf16.msra.mxu0 %v1910
    %1963 = vmatprep.subr.bf16.mxu0 0
    %1964 = vmatpush2.bf16.msra.mxu0 %v1909
    %1965 = vmatprep.mubr.bf16.mxu0 %v1797
    %1966 = vmatmul.mubr.bf16.gmra.mxu0 %v1796
    %v1967 = vpop.f32.mrf.mxu0
    %v1968 = vadd.f32 %v1835, %v1967
    %v1969 = vpop.f32.mrf.mxu0
    %v1970 = vpop.f32.mrf.mxu0
    %v1971 = vadd.f32 %v1835, %v1970
    %v1972 = vpop.f32.mrf.mxu0
    %1973 = vdwg.mxu0
    %v1974 = vadd.f32 %v1683, %v1968
    %v1975 = vadd.f32 %v1684, %v1971
    %v1976 = vld [vmem:[%s55] sm:$0x1]
    %v1977 = vld [vmem:[%s57] sm:$0x1]
    %v1978 = vsel %vm213, %v1974, 0.0
    %1979 = vadd.xlane.f32.xlu0 %v1978
    %v1980 = vpop.xlane.xlu0 %1979
    %v1981 = vsel %vm213, %v1975, 0.0
    %1982 = vadd.xlane.f32.xlu0 %v1981
    %v1983 = vpop.xlane.xlu0 %1982
    %v1984 = vmul.f32 %v1980, %v743
    %v1985 = vmul.f32 %v1983, %v743
    %v1986 = vsub.f32 %v1974, %v1984
    %v1987 = vsub.f32 %v1975, %v1985
    %v1988 = vmul.f32 %v1986, %v1986
    %v1989 = vmul.f32 %v1987, %v1987
    %v1990 = vsel %vm213, %v1988, 0.0
    %1991 = vadd.xlane.f32.xlu0 %v1990
    %v1992 = vpop.xlane.xlu0 %1991
    %v1993 = vsel %vm213, %v1989, 0.0
    %1994 = vadd.xlane.f32.xlu0 %v1993
    %v1995 = vpop.xlane.xlu0 %1994
    %v1996 = vmul.f32 %v1992, %v743
    %v1997 = vmul.f32 %v1995, %v743
    %v1998 = vadd.f32 %v1996, 1e-05
    %v1999 = vadd.f32 %v1997, 1e-05
    %v2000 = vrsqrt.pop %v1998
    %v2001 = vrsqrt.pop %v1999
    %v2002 = vmul.f32 %v1986, %v2000
    %v2003 = vmul.f32 %v1987, %v2001
    %v2005 = vlaneseq
    %v2006 = vshrl.u32 %v2005, 7
    %v2007 = vsub.s32 0, %v2006
    %v2008 = vrot.slane %v1976, %v2007
    %v2010 = vmul.f32 %v2002, %v2008
    %v2011 = vmul.f32 %v2003, %v2008
    %v2013 = vlaneseq
    %v2014 = vshrl.u32 %v2013, 7
    %v2015 = vsub.s32 0, %v2014
    %v2016 = vrot.slane %v1977, %v2015
    %v2018 = vadd.f32 %v2010, %v2016
    %v2019 = vadd.f32 %v2011, %v2016
    %v2020 = vld [vmem:[%s9] sm:$0x1]
    %v2021 = vpack.c.bf16 %v2019, %v2018
    %vm2022 = vcmask 130048
    %v2024 = vsel %vm2022, %v2020, 0
    %2026 = vmatprep.subr.bf16.mxu0 0
    %2027 = vmatpush1.bf16.msra.mxu0 0
    %2028 = vmatprep.subr.bf16.mxu0 0
    %2029 = vmatpush1.bf16.msra.mxu0 0
    %2030 = vmatprep.subr.bf16.mxu0 0
    %2031 = vmatpush1.bf16.msra.mxu0 0
    %2032 = vmatprep.subr.bf16.mxu0 0
    %2033 = vmatpush1.bf16.msra.mxu0 0
    %2034 = vmatprep.subr.bf16.mxu0 0
    %2035 = vmatpush1.bf16.msra.mxu0 0
    %2036 = vmatprep.subr.bf16.mxu0 0
    %2037 = vmatpush1.bf16.msra.mxu0 0
    %2038 = vmatprep.subr.bf16.mxu0 0
    %2039 = vmatpush1.bf16.msra.mxu0 0
    %2040 = vmatprep.subr.bf16.mxu0 0
    %2041 = vmatpush1.bf16.msra.mxu0 %v2021
    %2042 = vmatprep.subr.bf16.mxu0 0
    %2043 = vmatpush2.bf16.msra.mxu0 0
    %2044 = vmatprep.subr.bf16.mxu0 0
    %2045 = vmatpush2.bf16.msra.mxu0 0
    %2046 = vmatprep.subr.bf16.mxu0 0
    %2047 = vmatpush2.bf16.msra.mxu0 0
    %2048 = vmatprep.subr.bf16.mxu0 0
    %2049 = vmatpush2.bf16.msra.mxu0 0
    %2050 = vmatprep.subr.bf16.mxu0 0
    %2051 = vmatpush2.bf16.msra.mxu0 0
    %2052 = vmatprep.subr.bf16.mxu0 0
    %2053 = vmatpush2.bf16.msra.mxu0 0
    %2054 = vmatprep.subr.bf16.mxu0 0
    %2055 = vmatpush2.bf16.msra.mxu0 0
    %2056 = vmatprep.subr.bf16.mxu0 0
    %2057 = vmatpush2.bf16.msra.mxu0 0
    %2058 = vmatprep.mubr.bf16.mxu0 0
    %2059 = vmatmul.mubr.bf16.gmra.mxu0 %v2024
    %v2060 = vpop.f32.mrf.mxu0
    %v2061 = vadd.f32 0.0, %v2060
    %v2062 = vpop.f32.mrf.mxu0
    %v2063 = vpop.f32.mrf.mxu0
    %v2064 = vpop.f32.mrf.mxu0
    %2065 = vdwg.mxu0
    %v2066 = vpack.c.bf16 %v2061, %v2061
    %v2067 = vld [vmem:[%s59] sm:$0xf]
    %v2068 = vld [vmem:[%s59 + $0x4] sm:$0xf]
    %v2069 = vld [vmem:[%s59 + $0x8] sm:$0xf]
    %v2070 = vld [vmem:[%s59 + $0xc] sm:$0xf]
    %v2071 = vld [vmem:[%s59 + $0x10] sm:$0xf]
    %v2072 = vld [vmem:[%s59 + $0x14] sm:$0xf]
    %v2073 = vld [vmem:[%s59 + $0x18] sm:$0xf]
    %v2074 = vld [vmem:[%s59 + $0x1c] sm:$0xf]
    %v2075 = vld [vmem:[%s61] sm:$0x1]
    %v2077 = vlaneseq
    %v2078 = vshrl.u32 %v2077, 7
    %v2079 = vsub.s32 0, %v2078
    %v2080 = vrot.slane %v2075, %v2079
    %v2090 = vunpack.c.l.b16 %v2067
    %v2091 = vunpack.c.l.b16 %v2068
    %v2092 = vunpack.c.l.b16 %v2069
    %v2093 = vunpack.c.l.b16 %v2070
    %v2094 = vunpack.c.l.b16 %v2071
    %v2095 = vunpack.c.l.b16 %v2072
    %v2096 = vunpack.c.l.b16 %v2073
    %v2097 = vunpack.c.l.b16 %v2074
    %v2098 = vpack.c.b16 %v2091, %v2090
    %v2099 = vpack.c.b16 %v2093, %v2092
    %v2100 = vpack.c.b16 %v2095, %v2094
    %v2101 = vpack.c.b16 %v2097, %v2096
    %v2107 = vsel %vm213, %v2066, 0
    %2109 = vmatprep.subr.bf16.mxu0 0
    %2110 = vmatpush1.bf16.msra.mxu0 0
    %2111 = vmatprep.subr.bf16.mxu0 0
    %2112 = vmatpush1.bf16.msra.mxu0 0
    %2113 = vmatprep.subr.bf16.mxu0 0
    %2114 = vmatpush1.bf16.msra.mxu0 0
    %2115 = vmatprep.subr.bf16.mxu0 0
    %2116 = vmatpush1.bf16.msra.mxu0 0
    %2117 = vmatprep.subr.bf16.mxu0 0
    %2118 = vmatpush1.bf16.msra.mxu0 %v2101
    %2119 = vmatprep.subr.bf16.mxu0 0
    %2120 = vmatpush1.bf16.msra.mxu0 %v2100
    %2121 = vmatprep.subr.bf16.mxu0 0
    %2122 = vmatpush1.bf16.msra.mxu0 %v2099
    %2123 = vmatprep.subr.bf16.mxu0 0
    %2124 = vmatpush1.bf16.msra.mxu0 %v2098
    %2125 = vmatprep.subr.bf16.mxu0 0
    %2126 = vmatpush2.bf16.msra.mxu0 0
    %2127 = vmatprep.subr.bf16.mxu0 0
    %2128 = vmatpush2.bf16.msra.mxu0 0
    %2129 = vmatprep.subr.bf16.mxu0 0
    %2130 = vmatpush2.bf16.msra.mxu0 0
    %2131 = vmatprep.subr.bf16.mxu0 0
    %2132 = vmatpush2.bf16.msra.mxu0 0
    %2133 = vmatprep.subr.bf16.mxu0 0
    %2134 = vmatpush2.bf16.msra.mxu0 0
    %2135 = vmatprep.subr.bf16.mxu0 0
    %2136 = vmatpush2.bf16.msra.mxu0 0
    %2137 = vmatprep.subr.bf16.mxu0 0
    %2138 = vmatpush2.bf16.msra.mxu0 0
    %2139 = vmatprep.subr.bf16.mxu0 0
    %2140 = vmatpush2.bf16.msra.mxu0 0
    %2141 = vmatprep.mubr.bf16.mxu0 0
    %2142 = vmatmul.mubr.bf16.gmra.mxu0 %v2107
    %v2143 = vpop.f32.mrf.mxu0
    %v2144 = vadd.f32 %v2080, %v2143
    %v2145 = vpop.f32.mrf.mxu0
    %v2146 = vpop.f32.mrf.mxu0
    %v2147 = vpop.f32.mrf.mxu0
    %2148 = vdwg.mxu0
    %vm2149 = vcmask 9216
    %2150 = vst.msk [vmem:[#allocation2] sm:$0x3] %vm2149, %v2144
    // Predicated region
    $region126: #{emg_transformer_forward.1} parent=1 // pred_check
      _
    $region127: #{emg_transformer_forward.1} parent=1 // pred_check_branch
      %2152 = sbr.rel (0) target = $region129
    $region128: #{emg_transformer_forward.1} parent=1 // pred_region
      %s2154 = ssub.s32 32, 32
      %2155 = vsyncadd [#allocation3], %s2154
      %s2157 = sshll.u32 [#allocation2], 4
      %s2158 = int_to_ptr.vmem [resolvable:$true] %s2157
      %2160 = dma.vmem_to_hbm [thread:$0]  %s2158, 32, %s63, [#allocation3]
    $region129: #{emg_transformer_forward.1} parent=1 // pred_fallthru
      _
    // Predicated region
    $region130: #{emg_transformer_forward.1} parent=1 // pred_check
      _
    $region131: #{emg_transformer_forward.1} parent=1 // pred_check_branch
      %2162 = sbr.rel (0) target = $region133
    $region132: #{emg_transformer_forward.1} parent=1 // pred_region
      %2163 = dma.done [#allocation3], 32
    $region133: #{emg_transformer_forward.1} parent=1 // pred_fallthru
      _
    %2164 = vsyncpa [#allocation3], 1

</llo_original>
